<compile_context>
chip_gen: v6e
topology: v6e:2x2x1
jax: 0.10.0
libtpu: 0.0.40
codegen_flags: <defaults>
</compile_context>

<pallas_src>
import itertools
import numpy as np
import jax
import jax.numpy as jnp
from jax.experimental import pallas as pl
from jax.experimental.pallas import tpu as pltpu


# ------------------------------ small helpers ------------------------------

def _round_up(n, m):
    return ((n + m - 1) // m) * m


def _padded_vmem_bytes(shape, dtype):
    """Bytes a block occupies in VMEM after (sublane, lane) tile padding."""
    itemsize = np.dtype(dtype).itemsize
    shape = tuple(int(s) for s in shape)
    if len(shape) == 1:
        shape = (1,) + shape
    lead = int(np.prod(shape[:-2])) if len(shape) > 2 else 1
    sub = {4: 8, 2: 16, 1: 32}.get(itemsize, 8)
    return lead * _round_up(shape[-2], sub) * _round_up(shape[-1], 128) * itemsize


# --------------------------------- kernels ----------------------------------

def make_controller_kernel():
    """Stand-in pretrained causal controller: 2-layer MLP, ReLU output."""
    # TODO(synk): the pretrained causal_controller architecture is not given in
    #             the source; a 2-layer MLP with ReLU output is used here.
    def kernel(z_ref, w1_ref, b1_ref, w2_ref, b2_ref, out_ref):
        f32, bf16 = jnp.float32, jnp.bfloat16
        h = jnp.maximum(jnp.dot(z_ref[...].astype(bf16), w1_ref[...],
                                preferred_element_type=f32) + b1_ref[...], 0.0)
        out_ref[...] = jnp.maximum(jnp.dot(h.astype(bf16), w2_ref[...],
                                           preferred_element_type=f32) + b2_ref[...], 0.0)
    return kernel


def make_group_kernel(depth, n_valid, batch_pad):
    """Per-gene-group masked generator block.

    For group g (grid axis, parallel):
      y0 = tf_all @ Wc[g] + noise @ Wn[g]          (TF gather folded into Wc)
      x  = BN_relu(y0)
      for d: x = BN_relu(x @ Wh[g, d])             (block-diagonal hidden)
      out = relu(x @ Wo[g] + bo[g])                (group's gene columns)

    Linear biases before BN are dropped: batch-stat BN cancels them exactly.
    BN batch stats exclude padded batch rows via a compile-time row weight.
    """
    inv_n = 1.0 / float(n_valid)

    def kernel(tf_ref, nz_ref, wc_ref, wn_ref, g_ref, b_ref, *rest):
        if depth > 0:
            wh_ref, wo_ref, bo_ref, out_ref = rest
        else:
            wo_ref, bo_ref, out_ref = rest
        f32, bf16 = jnp.float32, jnp.bfloat16

        # BN row weights (hoisted, compile-time batch): (8, Bp) so the stats
        # matmul uses a full sublane of MXU rows; padded rows get weight 0.
        ids = jax.lax.broadcasted_iota(jnp.int32, (8, batch_pad), 1)
        rw = jnp.where(ids < n_valid, inv_n, 0.0).astype(f32)

        gam = g_ref[0]            # (depth+1, GH) f32
        bet = b_ref[0]            # (depth+1, GH) f32

        def bn_relu(y, d):
            # Batch stats on the MXU; BN affine folded into one FMA.
            mean = jnp.dot(rw, y, preferred_element_type=f32)[0:1]
            ex2 = jnp.dot(rw, y * y, preferred_element_type=f32)[0:1]
            # TODO(synk): one-pass variance; switch to two-pass for deep /
            #             large-mean configurations.
            var = jnp.maximum(ex2 - mean * mean, 0.0)
            scale = gam[d:d + 1] * jax.lax.rsqrt(var + 1e-5)
            shift = bet[d:d + 1] - mean * scale
            return jnp.maximum(y * scale + shift, 0.0)

        # input layer (bias dropped: cancelled by the BN that follows)
        y = (jnp.dot(tf_ref[...].astype(bf16), wc_ref[0], preferred_element_type=f32)
             + jnp.dot(nz_ref[...].astype(bf16), wn_ref[0], preferred_element_type=f32))
        x = bn_relu(y, 0)
        for d in range(depth):
            y = jnp.dot(x.astype(bf16), wh_ref[0, d], preferred_element_type=f32)
            x = bn_relu(y, d + 1)

        out_ref[...] = jnp.maximum(
            jnp.dot(x.astype(bf16), wo_ref[0], preferred_element_type=f32) + bo_ref[0],
            0.0)
    return kernel


def make_assemble_kernel(library_size):
    """cells = tf_all * tf_column_mask + gene_all @ P  (exact 0/1 scatter), + LSN."""
    def kernel(tf_ref, gene_ref, tfmask_ref, perm_ref, out_ref):
        f32 = jnp.float32
        cells = tf_ref[...] * tfmask_ref[...] + jnp.dot(
            gene_ref[...], perm_ref[...], preferred_element_type=f32)
        if library_size is not None:
            # TODO(synk): LSN class body is not in the source; standard
            # library-size normalization (rows rescaled to sum to library_size).
            s = jnp.sum(cells, axis=1, keepdims=True)
            cells = cells * jnp.where(s > 0.0, library_size / s, 0.0)
        out_ref[...] = cells
    return kernel


# ------------------------------- model wrapper ------------------------------

class CausalGeneratorPallas:
    def __init__(self, z_input, noise_per_gene, depth_per_gene,
                 width_scale_per_gene, causal_graph, library_size,
                 cc_hidden=32, genes_per_group=None, seed=0):
        self.z_input = z_input
        self.noise_per_gene = noise_per_gene
        self.depth_per_gene = depth_per_gene
        self.width_scale_per_gene = width_scale_per_gene
        self.causal_graph = causal_graph
        self.library_size = library_size
        self.library_size_f = float(library_size) if library_size is not None else None

        self.genes = list(causal_graph.keys())
        self.regulators = list(itertools.chain.from_iterable(causal_graph.values()))
        self.tfs = sorted(set(self.regulators))           # deterministic list(set(...))
        self.num_genes = len(self.genes)
        self.num_tfs = len(self.tfs)
        self.num_noises = self.num_genes * noise_per_gene
        self.C = self.num_tfs + self.num_genes

        all_nodes = set(self.tfs) | set(self.genes)
        assert min(all_nodes) >= 0 and max(all_nodes) < self.C, \
            "tf/gene node indices must lie in [0, num_tfs + num_genes)"

        hidden_dims = (len(self.regulators) + self.num_noises) * width_scale_per_gene
        self.hidden_dims = hidden_dims
        self.Cp = _round_up(self.C, 128)

        # ---------------- masks exactly as in _create_generator -------------
        input_mask = np.zeros((self.num_tfs, hidden_dims), np.float32)
        hidden_mask = np.zeros((hidden_dims, hidden_dims), np.float32)
        output_mask = np.zeros((hidden_dims, self.num_genes), np.float32)
        noise_rows = []
        prev = 0
        gene_widths = []
        for gene, gene_regulators in causal_graph.items():
            gi = self.genes.index(gene)
            cur = width_scale_per_gene * (len(gene_regulators) + noise_per_gene)
            gene_widths.append(cur)
            for reg in gene_regulators:
                input_mask[self.tfs.index(reg), prev:prev + cur] = 1.0
            nm = np.zeros((noise_per_gene, hidden_dims), np.float32)
            nm[:, prev:prev + cur] = 1.0
            noise_rows.append(nm)
            hidden_mask[prev:prev + cur, prev:prev + cur] = 1.0
            output_mask[prev:prev + cur, gi] = 1.0
            prev += cur
        input_mask = np.concatenate([input_mask] + noise_rows, axis=0)
        starts = np.concatenate(([0], np.cumsum(gene_widths))).astype(int)

        # ---------------- gene grouping (block-diagonal tiling) -------------
        if genes_per_group is None:
            genes_per_group = max(1, 256 // max(gene_widths))
        self.GPG = max(1, min(genes_per_group, self.num_genes))
        self.num_groups = -(-self.num_genes // self.GPG)
        group_widths = [int(starts[min((g + 1) * self.GPG, self.num_genes)]
                            - starts[g * self.GPG]) for g in range(self.num_groups)]
        self.GH = _round_up(max(group_widths), 128)
        self.GOUTp = _round_up(self.GPG, 128)

        # ---------------- deterministic parameter init ----------------------
        key = jax.random.PRNGKey(seed)
        keys = iter(jax.random.split(key, 16 + 2 * depth_per_gene))

        def dense(k, fi, fo):
            return np.asarray(jax.random.normal(k, (fi, fo), jnp.float32)) * np.sqrt(2.0 / fi)

        w1 = dense(next(keys), z_input, cc_hidden)
        b1 = np.zeros((1, cc_hidden), np.float32)
        w2_full = dense(next(keys), cc_hidden, self.C)
        b2_full = 0.1 * np.ones((1, self.C), np.float32)

        def blk(k1, k2, mask):                            # MaskedLinear + BN params
            fi, fo = mask.shape
            w = dense(k1, fi, fo) * mask                  # reapply_mask()
            b = 0.01 * np.asarray(jax.random.normal(k2, (1, fo), jnp.float32))
            return w, b, np.ones((1, fo), np.float32), np.zeros((1, fo), np.float32)

        gen_blocks = [blk(next(keys), next(keys), input_mask)]
        for _ in range(depth_per_gene):
            gen_blocks.append(blk(next(keys), next(keys), hidden_mask))
        w_out = dense(next(keys), hidden_dims, self.num_genes) * output_mask
        b_out = np.zeros((1, self.num_genes), np.float32)  # zero-init final bias

        # ---------------- per-group (streamed) kernel parameters ------------
        f32n = np.float32
        D, NG, GPG, GH, GOUTp = depth_per_gene, self.num_genes, self.GPG, self.GH, self.GOUTp
        ngrp, Cp, NN = self.num_groups, self.Cp, self.num_noises

        wc = np.zeros((ngrp, Cp, GH), f32n)
        wn = np.zeros((ngrp, NN, GH), f32n)
        gam = np.zeros((ngrp, D + 1, GH), f32n)
        bet = np.zeros((ngrp, D + 1, GH), f32n)
        wh = np.zeros((ngrp, D, GH, GH), f32n) if D > 0 else None
        wo = np.zeros((ngrp, GH, GOUTp), f32n)
        bo = np.zeros((ngrp, 1, GOUTp), f32n)
        perm = np.zeros((ngrp * GOUTp, Cp), f32n)          # exact gene scatter
        tfs_arr = np.asarray(self.tfs, np.int64)

        w_in_full, _, g_in_full, be_in_full = gen_blocks[0]
        hidden_blocks = gen_blocks[1:]

        for g in range(ngrp):
            glo, ghi = g * GPG, min((g + 1) * GPG, NG)
            hs, he = int(starts[glo]), int(starts[ghi])
            wgw, ngg = he - hs, ghi - glo
            # TF gather folded into the controller-column rows of wc
            wc[g, tfs_arr, :wgw] = w_in_full[:self.num_tfs, hs:he]
            wn[g, :, :wgw] = w_in_full[self.num_tfs:, hs:he]
            gam[g, 0, :wgw] = g_in_full[0, hs:he]
            bet[g, 0, :wgw] = be_in_full[0, hs:he]
            for d in range(D):
                whd, _, gh_, beh_ = hidden_blocks[d]
                wh[g, d, :wgw, :wgw] = whd[hs:he, hs:he]   # block-diagonal slice (exact)
                gam[g, d + 1, :wgw] = gh_[0, hs:he]
                bet[g, d + 1, :wgw] = beh_[0, hs:he]
            wo[g, :wgw, :ngg] = w_out[hs:he, glo:ghi]
            bo[g, 0, :ngg] = b_out[0, glo:ghi]
            for j in range(ngg):
                perm[g * GOUTp + j, self.genes[glo + j]] = 1.0

        bf = jnp.bfloat16
        w2p = np.zeros((cc_hidden, Cp), f32n); w2p[:, :self.C] = w2_full
        b2p = np.zeros((1, Cp), f32n); b2p[0, :self.C] = b2_full[0]
        self.k_w1 = jnp.asarray(w1, bf)
        self.k_b1 = jnp.asarray(b1)
        self.k_w2 = jnp.asarray(w2p, bf)
        self.k_b2 = jnp.asarray(b2p)
        self.k_wc = jnp.asarray(wc, bf)
        self.k_wn = jnp.asarray(wn, bf)
        self.k_gamma = jnp.asarray(gam)
        self.k_beta = jnp.asarray(bet)
        self.k_wh = jnp.asarray(wh, bf) if D > 0 else None
        self.k_wo = jnp.asarray(wo, bf)
        self.k_bo = jnp.asarray(bo)
        self.k_perm = jnp.asarray(perm)
        tfmask = np.zeros((1, Cp), f32n)
        tfmask[0, np.asarray(self.tfs)] = 1.0
        self.k_tfmask = jnp.asarray(tfmask)

        # unfolded parameters for the pure-JAX reference (same bf16 bits;
        # reference keeps the pre-BN biases that the kernel drops -> BN cancels)
        self.ref = dict(
            w1=jnp.asarray(w1, bf), b1=jnp.asarray(b1),
            w2=jnp.asarray(w2_full, bf), b2=jnp.asarray(b2_full),
            blocks=[(jnp.asarray(w, bf), jnp.asarray(b), jnp.asarray(g_), jnp.asarray(be_))
                    for (w, b, g_, be_) in gen_blocks],
            w_out=jnp.asarray(w_out, bf), b_out=jnp.asarray(b_out))
        self.tfs_idx = jnp.asarray(self.tfs, jnp.int32)
        self.genes_idx = jnp.asarray(self.genes, jnp.int32)

    # ------------------------- Pallas-backed forward -------------------------

    def forward(self, z_noise, gen_noise):
        """z_noise: (B, z_input); gen_noise: (B, num_noises). Returns (B, C)."""
        # TODO(synk): pert_mode TF/noise caching of the original module is not
        #             implemented (inference path without perturbation).
        B = z_noise.shape[0]
        Bp = _round_up(max(B, 16), 16)     # bf16 sublane packing; batch grid at large B
        zp = jnp.pad(z_noise.astype(jnp.float32), ((0, Bp - B), (0, 0)))
        nzp = jnp.pad(gen_noise.astype(jnp.float32), ((0, Bp - B), (0, 0)))

        vmem_spec = pl.BlockSpec(memory_space=pltpu.MemorySpace.VMEM)
        D = self.depth_per_gene

        # ---- stage A: causal controller (small, grid-less) ----
        tf_all = pl.pallas_call(
            make_controller_kernel(),
            out_shape=jax.ShapeDtypeStruct((Bp, self.Cp), jnp.float32),
            in_specs=[vmem_spec] * 5,
            out_specs=vmem_spec,
        )(zp, self.k_w1, self.k_b1, self.k_w2, self.k_b2)

        # ---- stage B: masked generator, grid over gene groups (streamed) ----
        args, specs, blocks = [], [], []

        def add(arg, block_shape, index_map):
            args.append(arg)
            specs.append(pl.BlockSpec(block_shape, index_map))
            blocks.append((block_shape, arg.dtype))

        add(tf_all, (Bp, self.Cp), lambda g: (0, 0))
        add(nzp, (Bp, self.num_noises), lambda g: (0, 0))
        add(self.k_wc, (1, self.Cp, self.GH), lambda g: (g, 0, 0))
        add(self.k_wn, (1, self.num_noises, self.GH), lambda g: (g, 0, 0))
        add(self.k_gamma, (1, D + 1, self.GH), lambda g: (g, 0, 0))
        add(self.k_beta, (1, D + 1, self.GH), lambda g: (g, 0, 0))
        if D > 0:
            add(self.k_wh, (1, D, self.GH, self.GH), lambda g: (g, 0, 0, 0))
        add(self.k_wo, (1, self.GH, self.GOUTp), lambda g: (g, 0, 0))
        add(self.k_bo, (1, 1, self.GOUTp), lambda g: (g, 0, 0))

        out_block = (Bp, self.GOUTp)
        blocks.append((out_block, np.float32))

        # derive the VMEM limit from actual tile-padded block bytes (x2 for
        # double-buffered streaming) + headroom; cap >=16 MiB under v7x's 64 MiB.
        resident = sum(_padded_vmem_bytes(s, d) for s, d in blocks)
        vmem_limit = int(min(2 * resident + (8 << 20), 48 << 20))

        gene_all = pl.pallas_call(
            make_group_kernel(D, B, Bp),
            out_shape=jax.ShapeDtypeStruct((Bp, self.num_groups * self.GOUTp),
                                           jnp.float32),
            grid_spec=pltpu.PrefetchScalarGridSpec(
                num_scalar_prefetch=0,
                grid=(self.num_groups,),
                in_specs=specs,
                out_specs=pl.BlockSpec(out_block, lambda g: (0, g))),
            compiler_params=pltpu.CompilerParams(
                dimension_semantics=("parallel",),
                vmem_limit_bytes=vmem_limit),
        )(*args)

        # ---- stage C: cells assembly (TF mask + exact gene scatter) + LSN ----
        cells = pl.pallas_call(
            make_assemble_kernel(self.library_size_f),
            out_shape=jax.ShapeDtypeStruct((Bp, self.Cp), jnp.float32),
            in_specs=[vmem_spec] * 4,
            out_specs=vmem_spec,
        )(tf_all, gene_all, self.k_tfmask, self.k_perm)

        return cells[:B, :self.C]     # keep this slice: padded rows are garbage

    # ------------------------------ pure-JAX ref ------------------------------

    def reference(self, z_noise, gen_noise):
        """Original (unfolded) formulation: controller -> gather -> concat ->
        masked MLP (with biases) -> index_add -> LSN. Same bf16 weights."""
        bf = lambda a: a.astype(jnp.bfloat16)
        f32 = jnp.float32
        p = self.ref
        h = jnp.maximum(jnp.dot(bf(z_noise), p["w1"], preferred_element_type=f32)
                        + p["b1"], 0.0)
        tf_all = jnp.maximum(jnp.dot(bf(h), p["w2"], preferred_element_type=f32)
                             + p["b2"], 0.0)
        tf_expr = tf_all[:, self.tfs_idx]
        B = tf_expr.shape[0]
        cells = jnp.zeros((B, self.C), f32)
        cells = cells.at[:, self.tfs_idx].add(tf_expr)
        x = jnp.concatenate([tf_expr, gen_noise.astype(f32)], axis=1)
        for (w, b, g, be) in p["blocks"]:
            y = jnp.dot(bf(x), w, preferred_element_type=f32) + b
            m = jnp.mean(y, axis=0, keepdims=True)
            v = jnp.mean((y - m) ** 2, axis=0, keepdims=True)
            x = jnp.maximum((y - m) / jnp.sqrt(v + 1e-5) * g + be, 0.0)
        gene = jnp.maximum(jnp.dot(bf(x), p["w_out"], preferred_element_type=f32)
                           + p["b_out"], 0.0)
        cells = cells.at[:, self.genes_idx].add(gene)
        if self.library_size is not None:
            s = jnp.sum(cells, axis=1, keepdims=True)
            cells = cells * jnp.where(s > 0, self.library_size / s, 0.0)
        return cells


# ----------------------------------- main -----------------------------------

if __name__ == "__main__":
    # small synthetic configuration
    z_input = 16
    noise_per_gene = 2
    depth_per_gene = 2
    width_scale_per_gene = 2
    library_size = 1000
    batch = 12                      # padded to 16 rows; BN row-mask exercised
    # bipartite, acyclic graph: TFs {0,2,5} regulate genes {1,3,4,6}
    causal_graph = {1: {0, 2}, 3: {0, 5}, 4: {2, 5}, 6: {0, 2}}

    model = CausalGeneratorPallas(
        z_input, noise_per_gene, depth_per_gene, width_scale_per_gene,
        causal_graph, library_size, genes_per_group=2, seed=0)

    key = jax.random.PRNGKey(0)
    k1, k2 = jax.random.split(key)
    z = jax.random.normal(k1, (batch, z_input), jnp.float32)
    gen_noise = jax.random.normal(k2, (batch, model.num_noises), jnp.float32)

    fwd = jax.jit(model.forward)
    cells = jax.block_until_ready(fwd(z, gen_noise))

    ref = model.reference(z, gen_noise)
    # tolerance covers bf16 MXU operands / accumulation-order differences
    np.testing.assert_allclose(np.asarray(cells), np.asarray(ref),
                               rtol=2e-2, atol=2e-2)
    print("KERNEL_OK")
</pallas_src>

<mosaic_0001>
module attributes {stable_mosaic.version = 11 : i64} {
  func.func @kernel(%arg0: memref<16x16xf32, #tpu.memory_space<vmem>>, %arg1: memref<16x32xbf16, #tpu.memory_space<vmem>>, %arg2: memref<1x32xf32, #tpu.memory_space<vmem>>, %arg3: memref<32x128xbf16, #tpu.memory_space<vmem>>, %arg4: memref<1x128xf32, #tpu.memory_space<vmem>>, %arg5: memref<16x128xf32, #tpu.memory_space<vmem>>) attributes {dimension_semantics = [], scalar_prefetch = 0 : i64, scratch_operands = 0 : i64, tpu.core_type = #tpu.core_type<tc>} {
    %c0 = arith.constant 0 : index
    %c0_0 = arith.constant 0 : index
    %0 = vector.load %arg0[%c0, %c0_0] : memref<16x16xf32, #tpu.memory_space<vmem>>, vector<16x16xf32>
    %1 = arith.truncf %0 : vector<16x16xf32> to vector<16x16xbf16>
    %c0_1 = arith.constant 0 : index
    %c0_2 = arith.constant 0 : index
    %2 = vector.load %arg1[%c0_1, %c0_2] : memref<16x32xbf16, #tpu.memory_space<vmem>>, vector<16x32xbf16>
    %cst = arith.constant dense<0.000000e+00> : vector<16x32xf32>
    %3 = tpu.matmul %1, %2, %cst {dimension_numbers = #tpu.dot_dimension_numbers<[1], [0], [0], [1], [0, 0, 1, 1], [], []>} : vector<16x16xbf16>, vector<16x32xbf16>, vector<16x32xf32> -> vector<16x32xf32>
    %c0_3 = arith.constant 0 : index
    %c0_4 = arith.constant 0 : index
    %4 = vector.load %arg2[%c0_3, %c0_4] : memref<1x32xf32, #tpu.memory_space<vmem>>, vector<1x32xf32>
    %5 = vector.broadcast %4 : vector<1x32xf32> to vector<16x32xf32>
    %6 = arith.addf %3, %5 : vector<16x32xf32>
    %cst_5 = arith.constant 0.000000e+00 : f32
    %7 = vector.broadcast %cst_5 : f32 to vector<16x32xf32>
    %8 = arith.maximumf %6, %7 : vector<16x32xf32>
    %9 = arith.truncf %8 : vector<16x32xf32> to vector<16x32xbf16>
    %c0_6 = arith.constant 0 : index
    %c0_7 = arith.constant 0 : index
    %10 = vector.load %arg3[%c0_6, %c0_7] : memref<32x128xbf16, #tpu.memory_space<vmem>>, vector<32x128xbf16>
    %cst_8 = arith.constant dense<0.000000e+00> : vector<16x128xf32>
    %11 = tpu.matmul %9, %10, %cst_8 {dimension_numbers = #tpu.dot_dimension_numbers<[1], [0], [0], [1], [0, 0, 1, 1], [], []>} : vector<16x32xbf16>, vector<32x128xbf16>, vector<16x128xf32> -> vector<16x128xf32>
    %c0_9 = arith.constant 0 : index
    %c0_10 = arith.constant 0 : index
    %12 = vector.load %arg4[%c0_9, %c0_10] : memref<1x128xf32, #tpu.memory_space<vmem>>, vector<1x128xf32>
    %13 = vector.broadcast %12 : vector<1x128xf32> to vector<16x128xf32>
    %14 = arith.addf %11, %13 : vector<16x128xf32>
    %cst_11 = arith.constant 0.000000e+00 : f32
    %15 = vector.broadcast %cst_11 : f32 to vector<16x128xf32>
    %16 = arith.maximumf %14, %15 : vector<16x128xf32>
    %c0_12 = arith.constant 0 : index
    %c0_13 = arith.constant 0 : index
    %17 = vector.load %arg5[%c0_12, %c0_13] : memref<16x128xf32, #tpu.memory_space<vmem>>, vector<16x128xf32>
    tpu.vector_store %arg5[%c0_12, %c0_13], %16 {strides = array<i32>} : memref<16x128xf32, #tpu.memory_space<vmem>>, vector<16x128xf32>,
    return
  }
}

module attributes {stable_mosaic.version = 11 : i64} {
  func.func @kernel(%arg0: memref<16x128xf32, #tpu.memory_space<vmem>>, %arg1: memref<16x256xf32, #tpu.memory_space<vmem>>, %arg2: memref<1x128xf32, #tpu.memory_space<vmem>>, %arg3: memref<256x128xf32, #tpu.memory_space<vmem>>, %arg4: memref<16x128xf32, #tpu.memory_space<vmem>>) attributes {dimension_semantics = [], scalar_prefetch = 0 : i64, scratch_operands = 0 : i64, tpu.core_type = #tpu.core_type<tc>} {
    %c0 = arith.constant 0 : index
    %c0_0 = arith.constant 0 : index
    %0 = vector.load %arg0[%c0, %c0_0] : memref<16x128xf32, #tpu.memory_space<vmem>>, vector<16x128xf32>
    %c0_1 = arith.constant 0 : index
    %c0_2 = arith.constant 0 : index
    %1 = vector.load %arg2[%c0_1, %c0_2] : memref<1x128xf32, #tpu.memory_space<vmem>>, vector<1x128xf32>
    %2 = vector.broadcast %1 : vector<1x128xf32> to vector<16x128xf32>
    %3 = arith.mulf %0, %2 : vector<16x128xf32>
    %c0_3 = arith.constant 0 : index
    %c0_4 = arith.constant 0 : index
    %4 = vector.load %arg1[%c0_3, %c0_4] : memref<16x256xf32, #tpu.memory_space<vmem>>, vector<16x256xf32>
    %c0_5 = arith.constant 0 : index
    %c0_6 = arith.constant 0 : index
    %5 = vector.load %arg3[%c0_5, %c0_6] : memref<256x128xf32, #tpu.memory_space<vmem>>, vector<256x128xf32>
    %cst = arith.constant dense<0.000000e+00> : vector<16x128xf32>
    %6 = tpu.matmul %4, %5, %cst {dimension_numbers = #tpu.dot_dimension_numbers<[1], [0], [0], [1], [0, 0, 1, 1], [], []>} : vector<16x256xf32>, vector<256x128xf32>, vector<16x128xf32> -> vector<16x128xf32>
    %7 = arith.addf %3, %6 : vector<16x128xf32>
    %cst_7 = arith.constant dense<0.000000e+00> : vector<16xf32>
    %8 = vector.multi_reduction <add>, %7, %cst_7 [1] : vector<16x128xf32> to vector<16xf32>
    %9 = vector.shape_cast %8 : vector<16xf32> to vector<16x1xf32>
    %cst_8 = arith.constant 0.000000e+00 : f32
    %10 = vector.broadcast %cst_8 : f32 to vector<16x1xf32>
    %11 = arith.cmpf ogt, %9, %10 : vector<16x1xf32>
    %cst_9 = arith.constant 1.000000e+03 : f32
    %12 = vector.broadcast %cst_9 : f32 to vector<16x1xf32>
    %13 = arith.divf %12, %9 : vector<16x1xf32>
    %cst_10 = arith.constant 0.000000e+00 : f32
    %14 = vector.broadcast %cst_10 : f32 to vector<16x1xf32>
    %15 = arith.select %11, %13, %14 : vector<16x1xi1>, vector<16x1xf32>
    %16 = vector.broadcast %15 : vector<16x1xf32> to vector<16x128xf32>
    %17 = arith.mulf %7, %16 : vector<16x128xf32>
    %c0_11 = arith.constant 0 : index
    %c0_12 = arith.constant 0 : index
    %18 = vector.load %arg4[%c0_11, %c0_12] : memref<16x128xf32, #tpu.memory_space<vmem>>, vector<16x128xf32>
    tpu.vector_store %arg4[%c0_11, %c0_12], %17 {strides = array<i32>} : memref<16x128xf32, #tpu.memory_space<vmem>>, vector<16x128xf32>,
    return
  }
}

module attributes {stable_mosaic.version = 11 : i64} {
  func.func @kernel(%arg0: i32, %arg1: memref<16x128xf32, #tpu.memory_space<vmem>>, %arg2: memref<16x8xf32, #tpu.memory_space<vmem>>, %arg3: memref<1x128x128xbf16, #tpu.memory_space<vmem>>, %arg4: memref<1x8x128xbf16, #tpu.memory_space<vmem>>, %arg5: memref<1x3x128xf32, #tpu.memory_space<vmem>>, %arg6: memref<1x3x128xf32, #tpu.memory_space<vmem>>, %arg7: memref<1x2x128x128xbf16, #tpu.memory_space<vmem>>, %arg8: memref<1x128x128xbf16, #tpu.memory_space<vmem>>, %arg9: memref<1x1x128xf32, #tpu.memory_space<vmem>>, %arg10: memref<16x128xf32, #tpu.memory_space<vmem>>) attributes {dimension_semantics = [#tpu.dimension_semantics<parallel>], iteration_bounds = array<i64: 2>, scalar_prefetch = 0 : i64, scratch_operands = 0 : i64, tpu.core_type = #tpu.core_type<tc>, window_params = [{pipeline_mode = #tpu.pipeline_mode<synchronous>, transform_indices = @transform_0, window_bounds = array<i64: 16, 128>}, {pipeline_mode = #tpu.pipeline_mode<synchronous>, transform_indices = @transform_1, window_bounds = array<i64: 16, 8>}, {transform_indices = @transform_2, window_bounds = array<i64: 1, 128, 128>}, {transform_indices = @transform_3, window_bounds = array<i64: 1, 8, 128>}, {transform_indices = @transform_4, window_bounds = array<i64: 1, 3, 128>}, {transform_indices = @transform_5, window_bounds = array<i64: 1, 3, 128>}, {transform_indices = @transform_6, window_bounds = array<i64: 1, 2, 128, 128>}, {transform_indices = @transform_7, window_bounds = array<i64: 1, 128, 128>}, {transform_indices = @transform_8, window_bounds = array<i64: 1, 1, 128>}, {transform_indices = @transform_9, window_bounds = array<i64: 16, 128>}]} {
    %0 = tpu.iota {dimensions = array<i32: 1>} : vector<8x16xi32>
    %c12_i32 = arith.constant 12 : i32
    %1 = vector.broadcast %c12_i32 : i32 to vector<8x16xi32>
    %2 = arith.cmpi slt, %0, %1 : vector<8x16xi32>
    %cst = arith.constant 0.0833333358 : f32
    %cst_0 = arith.constant 0.000000e+00 : f32
    %3 = vector.broadcast %cst : f32 to vector<8x16xf32>
    %4 = vector.broadcast %cst_0 : f32 to vector<8x16xf32>
    %5 = arith.select %2, %3, %4 : vector<8x16xi1>, vector<8x16xf32>
    %c0 = arith.constant 0 : index
    %c0_1 = arith.constant 0 : index
    %c0_2 = arith.constant 0 : index
    %6 = vector.load %arg5[%c0, %c0_1, %c0_2] : memref<1x3x128xf32, #tpu.memory_space<vmem>>, vector<1x3x128xf32>
    %7 = vector.shape_cast %6 : vector<1x3x128xf32> to vector<3x128xf32>
    %c0_3 = arith.constant 0 : index
    %c0_4 = arith.constant 0 : index
    %c0_5 = arith.constant 0 : index
    %8 = vector.load %arg6[%c0_3, %c0_4, %c0_5] : memref<1x3x128xf32, #tpu.memory_space<vmem>>, vector<1x3x128xf32>
    %9 = vector.shape_cast %8 : vector<1x3x128xf32> to vector<3x128xf32>
    %c0_6 = arith.constant 0 : index
    %c0_7 = arith.constant 0 : index
    %10 = vector.load %arg1[%c0_6, %c0_7] : memref<16x128xf32, #tpu.memory_space<vmem>>, vector<16x128xf32>
    %11 = arith.truncf %10 : vector<16x128xf32> to vector<16x128xbf16>
    %c0_8 = arith.constant 0 : index
    %c0_9 = arith.constant 0 : index
    %c0_10 = arith.constant 0 : index
    %12 = vector.load %arg3[%c0_8, %c0_9, %c0_10] : memref<1x128x128xbf16, #tpu.memory_space<vmem>>, vector<1x128x128xbf16>
    %13 = vector.shape_cast %12 : vector<1x128x128xbf16> to vector<128x128xbf16>
    %cst_11 = arith.constant dense<0.000000e+00> : vector<16x128xf32>
    %14 = tpu.matmul %11, %13, %cst_11 {dimension_numbers = #tpu.dot_dimension_numbers<[1], [0], [0], [1], [0, 0, 1, 1], [], []>} : vector<16x128xbf16>, vector<128x128xbf16>, vector<16x128xf32> -> vector<16x128xf32>
    %c0_12 = arith.constant 0 : index
    %c0_13 = arith.constant 0 : index
    %15 = vector.load %arg2[%c0_12, %c0_13] : memref<16x8xf32, #tpu.memory_space<vmem>>, vector<16x8xf32>
    %16 = arith.truncf %15 : vector<16x8xf32> to vector<16x8xbf16>
    %c0_14 = arith.constant 0 : index
    %c0_15 = arith.constant 0 : index
    %c0_16 = arith.constant 0 : index
    %17 = vector.load %arg4[%c0_14, %c0_15, %c0_16] : memref<1x8x128xbf16, #tpu.memory_space<vmem>>, vector<1x8x128xbf16>
    %18 = vector.shape_cast %17 : vector<1x8x128xbf16> to vector<8x128xbf16>
    %cst_17 = arith.constant dense<0.000000e+00> : vector<16x128xf32>
    %19 = tpu.matmul %16, %18, %cst_17 {dimension_numbers = #tpu.dot_dimension_numbers<[1], [0], [0], [1], [0, 0, 1, 1], [], []>} : vector<16x8xbf16>, vector<8x128xbf16>, vector<16x128xf32> -> vector<16x128xf32>
    %20 = arith.addf %14, %19 : vector<16x128xf32>
    %cst_18 = arith.constant dense<0.000000e+00> : vector<8x128xf32>
    %21 = tpu.matmul %5, %20, %cst_18 {dimension_numbers = #tpu.dot_dimension_numbers<[1], [0], [0], [1], [0, 0, 1, 1], [], []>} : vector<8x16xf32>, vector<16x128xf32>, vector<8x128xf32> -> vector<8x128xf32>
    %22 = vector.extract_strided_slice %21 {offsets = [0, 0], sizes = [1, 128], strides = [1, 1]} : vector<8x128xf32> to vector<1x128xf32>
    %23 = arith.mulf %20, %20 : vector<16x128xf32>
    %cst_19 = arith.constant dense<0.000000e+00> : vector<8x128xf32>
    %24 = tpu.matmul %5, %23, %cst_19 {dimension_numbers = #tpu.dot_dimension_numbers<[1], [0], [0], [1], [0, 0, 1, 1], [], []>} : vector<8x16xf32>, vector<16x128xf32>, vector<8x128xf32> -> vector<8x128xf32>
    %25 = vector.extract_strided_slice %24 {offsets = [0, 0], sizes = [1, 128], strides = [1, 1]} : vector<8x128xf32> to vector<1x128xf32>
    %26 = arith.mulf %22, %22 : vector<1x128xf32>
    %27 = arith.subf %25, %26 : vector<1x128xf32>
    %cst_20 = arith.constant 0.000000e+00 : f32
    %28 = vector.broadcast %cst_20 : f32 to vector<1x128xf32>
    %29 = arith.maximumf %27, %28 : vector<1x128xf32>
    %30 = vector.extract_strided_slice %7 {offsets = [0, 0], sizes = [1, 128], strides = [1, 1]} : vector<3x128xf32> to vector<1x128xf32>
    %cst_21 = arith.constant 9.99999974E-6 : f32
    %31 = vector.broadcast %cst_21 : f32 to vector<1x128xf32>
    %32 = arith.addf %29, %31 : vector<1x128xf32>
    %33 = math.rsqrt %32 : vector<1x128xf32>
    %34 = arith.mulf %30, %33 : vector<1x128xf32>
    %35 = vector.extract_strided_slice %9 {offsets = [0, 0], sizes = [1, 128], strides = [1, 1]} : vector<3x128xf32> to vector<1x128xf32>
    %36 = arith.mulf %22, %34 : vector<1x128xf32>
    %37 = arith.subf %35, %36 : vector<1x128xf32>
    %38 = vector.broadcast %34 : vector<1x128xf32> to vector<16x128xf32>
    %39 = arith.mulf %20, %38 : vector<16x128xf32>
    %40 = vector.broadcast %37 : vector<1x128xf32> to vector<16x128xf32>
    %41 = arith.addf %39, %40 : vector<16x128xf32>
    %cst_22 = arith.constant 0.000000e+00 : f32
    %42 = vector.broadcast %cst_22 : f32 to vector<16x128xf32>
    %43 = arith.maximumf %41, %42 : vector<16x128xf32>
    %44 = arith.truncf %43 : vector<16x128xf32> to vector<16x128xbf16>
    %c0_23 = arith.constant 0 : index
    %c0_24 = arith.constant 0 : index
    %c0_25 = arith.constant 0 : index
    %c0_26 = arith.constant 0 : index
    %45 = vector.load %arg7[%c0_23, %c0_24, %c0_25, %c0_26] : memref<1x2x128x128xbf16, #tpu.memory_space<vmem>>, vector<1x1x128x128xbf16>
    %46 = vector.shape_cast %45 : vector<1x1x128x128xbf16> to vector<128x128xbf16>
    %cst_27 = arith.constant dense<0.000000e+00> : vector<16x128xf32>
    %47 = tpu.matmul %44, %46, %cst_27 {dimension_numbers = #tpu.dot_dimension_numbers<[1], [0], [0], [1], [0, 0, 1, 1], [], []>} : vector<16x128xbf16>, vector<128x128xbf16>, vector<16x128xf32> -> vector<16x128xf32>
    %cst_28 = arith.constant dense<0.000000e+00> : vector<8x128xf32>
    %48 = tpu.matmul %5, %47, %cst_28 {dimension_numbers = #tpu.dot_dimension_numbers<[1], [0], [0], [1], [0, 0, 1, 1], [], []>} : vector<8x16xf32>, vector<16x128xf32>, vector<8x128xf32> -> vector<8x128xf32>
    %49 = vector.extract_strided_slice %48 {offsets = [0, 0], sizes = [1, 128], strides = [1, 1]} : vector<8x128xf32> to vector<1x128xf32>
    %50 = arith.mulf %47, %47 : vector<16x128xf32>
    %cst_29 = arith.constant dense<0.000000e+00> : vector<8x128xf32>
    %51 = tpu.matmul %5, %50, %cst_29 {dimension_numbers = #tpu.dot_dimension_numbers<[1], [0], [0], [1], [0, 0, 1, 1], [], []>} : vector<8x16xf32>, vector<16x128xf32>, vector<8x128xf32> -> vector<8x128xf32>
    %52 = vector.extract_strided_slice %51 {offsets = [0, 0], sizes = [1, 128], strides = [1, 1]} : vector<8x128xf32> to vector<1x128xf32>
    %53 = arith.mulf %49, %49 : vector<1x128xf32>
    %54 = arith.subf %52, %53 : vector<1x128xf32>
    %cst_30 = arith.constant 0.000000e+00 : f32
    %55 = vector.broadcast %cst_30 : f32 to vector<1x128xf32>
    %56 = arith.maximumf %54, %55 : vector<1x128xf32>
    %57 = vector.extract_strided_slice %7 {offsets = [1, 0], sizes = [1, 128], strides = [1, 1]} : vector<3x128xf32> to vector<1x128xf32>
    %cst_31 = arith.constant 9.99999974E-6 : f32
    %58 = vector.broadcast %cst_31 : f32 to vector<1x128xf32>
    %59 = arith.addf %56, %58 : vector<1x128xf32>
    %60 = math.rsqrt %59 : vector<1x128xf32>
    %61 = arith.mulf %57, %60 : vector<1x128xf32>
    %62 = vector.extract_strided_slice %9 {offsets = [1, 0], sizes = [1, 128], strides = [1, 1]} : vector<3x128xf32> to vector<1x128xf32>
    %63 = arith.mulf %49, %61 : vector<1x128xf32>
    %64 = arith.subf %62, %63 : vector<1x128xf32>
    %65 = vector.broadcast %61 : vector<1x128xf32> to vector<16x128xf32>
    %66 = arith.mulf %47, %65 : vector<16x128xf32>
    %67 = vector.broadcast %64 : vector<1x128xf32> to vector<16x128xf32>
    %68 = arith.addf %66, %67 : vector<16x128xf32>
    %cst_32 = arith.constant 0.000000e+00 : f32
    %69 = vector.broadcast %cst_32 : f32 to vector<16x128xf32>
    %70 = arith.maximumf %68, %69 : vector<16x128xf32>
    %71 = arith.truncf %70 : vector<16x128xf32> to vector<16x128xbf16>
    %c0_33 = arith.constant 0 : index
    %c1 = arith.constant 1 : index
    %c0_34 = arith.constant 0 : index
    %c0_35 = arith.constant 0 : index
    %72 = vector.load %arg7[%c0_33, %c1, %c0_34, %c0_35] : memref<1x2x128x128xbf16, #tpu.memory_space<vmem>>, vector<1x1x128x128xbf16>
    %73 = vector.shape_cast %72 : vector<1x1x128x128xbf16> to vector<128x128xbf16>
    %cst_36 = arith.constant dense<0.000000e+00> : vector<16x128xf32>
    %74 = tpu.matmul %71, %73, %cst_36 {dimension_numbers = #tpu.dot_dimension_numbers<[1], [0], [0], [1], [0, 0, 1, 1], [], []>} : vector<16x128xbf16>, vector<128x128xbf16>, vector<16x128xf32> -> vector<16x128xf32>
    %cst_37 = arith.constant dense<0.000000e+00> : vector<8x128xf32>
    %75 = tpu.matmul %5, %74, %cst_37 {dimension_numbers = #tpu.dot_dimension_numbers<[1], [0], [0], [1], [0, 0, 1, 1], [], []>} : vector<8x16xf32>, vector<16x128xf32>, vector<8x128xf32> -> vector<8x128xf32>
    %76 = vector.extract_strided_slice %75 {offsets = [0, 0], sizes = [1, 128], strides = [1, 1]} : vector<8x128xf32> to vector<1x128xf32>
    %77 = arith.mulf %74, %74 : vector<16x128xf32>
    %cst_38 = arith.constant dense<0.000000e+00> : vector<8x128xf32>
    %78 = tpu.matmul %5, %77, %cst_38 {dimension_numbers = #tpu.dot_dimension_numbers<[1], [0], [0], [1], [0, 0, 1, 1], [], []>} : vector<8x16xf32>, vector<16x128xf32>, vector<8x128xf32> -> vector<8x128xf32>
    %79 = vector.extract_strided_slice %78 {offsets = [0, 0], sizes = [1, 128], strides = [1, 1]} : vector<8x128xf32> to vector<1x128xf32>
    %80 = arith.mulf %76, %76 : vector<1x128xf32>
    %81 = arith.subf %79, %80 : vector<1x128xf32>
    %cst_39 = arith.constant 0.000000e+00 : f32
    %82 = vector.broadcast %cst_39 : f32 to vector<1x128xf32>
    %83 = arith.maximumf %81, %82 : vector<1x128xf32>
    %84 = vector.extract_strided_slice %7 {offsets = [2, 0], sizes = [1, 128], strides = [1, 1]} : vector<3x128xf32> to vector<1x128xf32>
    %cst_40 = arith.constant 9.99999974E-6 : f32
    %85 = vector.broadcast %cst_40 : f32 to vector<1x128xf32>
    %86 = arith.addf %83, %85 : vector<1x128xf32>
    %87 = math.rsqrt %86 : vector<1x128xf32>
    %88 = arith.mulf %84, %87 : vector<1x128xf32>
    %89 = vector.extract_strided_slice %9 {offsets = [2, 0], sizes = [1, 128], strides = [1, 1]} : vector<3x128xf32> to vector<1x128xf32>
    %90 = arith.mulf %76, %88 : vector<1x128xf32>
    %91 = arith.subf %89, %90 : vector<1x128xf32>
    %92 = vector.broadcast %88 : vector<1x128xf32> to vector<16x128xf32>
    %93 = arith.mulf %74, %92 : vector<16x128xf32>
    %94 = vector.broadcast %91 : vector<1x128xf32> to vector<16x128xf32>
    %95 = arith.addf %93, %94 : vector<16x128xf32>
    %cst_41 = arith.constant 0.000000e+00 : f32
    %96 = vector.broadcast %cst_41 : f32 to vector<16x128xf32>
    %97 = arith.maximumf %95, %96 : vector<16x128xf32>
    %98 = arith.truncf %97 : vector<16x128xf32> to vector<16x128xbf16>
    %c0_42 = arith.constant 0 : index
    %c0_43 = arith.constant 0 : index
    %c0_44 = arith.constant 0 : index
    %99 = vector.load %arg8[%c0_42, %c0_43, %c0_44] : memref<1x128x128xbf16, #tpu.memory_space<vmem>>, vector<1x128x128xbf16>
    %100 = vector.shape_cast %99 : vector<1x128x128xbf16> to vector<128x128xbf16>
    %cst_45 = arith.constant dense<0.000000e+00> : vector<16x128xf32>
    %101 = tpu.matmul %98, %100, %cst_45 {dimension_numbers = #tpu.dot_dimension_numbers<[1], [0], [0], [1], [0, 0, 1, 1], [], []>} : vector<16x128xbf16>, vector<128x128xbf16>, vector<16x128xf32> -> vector<16x128xf32>
    %c0_46 = arith.constant 0 : index
    %c0_47 = arith.constant 0 : index
    %c0_48 = arith.constant 0 : index
    %102 = vector.load %arg9[%c0_46, %c0_47, %c0_48] : memref<1x1x128xf32, #tpu.memory_space<vmem>>, vector<1x1x128xf32>
    %103 = vector.shape_cast %102 : vector<1x1x128xf32> to vector<1x128xf32>
    %104 = vector.broadcast %103 : vector<1x128xf32> to vector<16x128xf32>
    %105 = arith.addf %101, %104 : vector<16x128xf32>
    %cst_49 = arith.constant 0.000000e+00 : f32
    %106 = vector.broadcast %cst_49 : f32 to vector<16x128xf32>
    %107 = arith.maximumf %105, %106 : vector<16x128xf32>
    %c0_50 = arith.constant 0 : index
    %c0_51 = arith.constant 0 : index
    %108 = vector.load %arg10[%c0_50, %c0_51] : memref<16x128xf32, #tpu.memory_space<vmem>>, vector<16x128xf32>
    tpu.vector_store %arg10[%c0_50, %c0_51], %107 {strides = array<i32>} : memref<16x128xf32, #tpu.memory_space<vmem>>, vector<16x128xf32>,
    return
  }
  func.func @transform_0(%arg0: i32) -> (i32, i32) {
    %c0_i32 = arith.constant 0 : i32
    %c0_i32_0 = arith.constant 0 : i32
    %c0_i32_1 = arith.constant 0 : i32
    return %c0_i32, %c0_i32_0 : i32, i32
  }
  func.func @transform_1(%arg0: i32) -> (i32, i32) {
    %c0_i32 = arith.constant 0 : i32
    %c0_i32_0 = arith.constant 0 : i32
    %c0_i32_1 = arith.constant 0 : i32
    return %c0_i32, %c0_i32_0 : i32, i32
  }
  func.func @transform_2(%arg0: i32) -> (i32, i32, i32) {
    %c0_i32 = arith.constant 0 : i32
    %c0_i32_0 = arith.constant 0 : i32
    %c0_i32_1 = arith.constant 0 : i32
    return %arg0, %c0_i32, %c0_i32_0 : i32, i32, i32
  }
  func.func @transform_3(%arg0: i32) -> (i32, i32, i32) {
    %c0_i32 = arith.constant 0 : i32
    %c0_i32_0 = arith.constant 0 : i32
    %c0_i32_1 = arith.constant 0 : i32
    return %arg0, %c0_i32, %c0_i32_0 : i32, i32, i32
  }
  func.func @transform_4(%arg0: i32) -> (i32, i32, i32) {
    %c0_i32 = arith.constant 0 : i32
    %c0_i32_0 = arith.constant 0 : i32
    %c0_i32_1 = arith.constant 0 : i32
    return %arg0, %c0_i32, %c0_i32_0 : i32, i32, i32
  }
  func.func @transform_5(%arg0: i32) -> (i32, i32, i32) {
    %c0_i32 = arith.constant 0 : i32
    %c0_i32_0 = arith.constant 0 : i32
    %c0_i32_1 = arith.constant 0 : i32
    return %arg0, %c0_i32, %c0_i32_0 : i32, i32, i32
  }
  func.func @transform_6(%arg0: i32) -> (i32, i32, i32, i32) {
    %c0_i32 = arith.constant 0 : i32
    %c0_i32_0 = arith.constant 0 : i32
    %c0_i32_1 = arith.constant 0 : i32
    %c0_i32_2 = arith.constant 0 : i32
    return %arg0, %c0_i32, %c0_i32_0, %c0_i32_1 : i32, i32, i32, i32
  }
  func.func @transform_7(%arg0: i32) -> (i32, i32, i32) {
    %c0_i32 = arith.constant 0 : i32
    %c0_i32_0 = arith.constant 0 : i32
    %c0_i32_1 = arith.constant 0 : i32
    return %arg0, %c0_i32, %c0_i32_0 : i32, i32, i32
  }
  func.func @transform_8(%arg0: i32) -> (i32, i32, i32) {
    %c0_i32 = arith.constant 0 : i32
    %c0_i32_0 = arith.constant 0 : i32
    %c0_i32_1 = arith.constant 0 : i32
    return %arg0, %c0_i32, %c0_i32_0 : i32, i32, i32
  }
  func.func @transform_9(%arg0: i32) -> (i32, i32) {
    %c0_i32 = arith.constant 0 : i32
    %c0_i32_0 = arith.constant 0 : i32
    return %c0_i32, %arg0 : i32, i32
  }
}

</mosaic_0001>

<llo_original>
// kernel: forward.3
$region0: #{forward.3}
  #allocation0 [shape = 'u32[]', space=smem, size = 0x4, offset = 0x4, fixed_abs, tag = 'smem constant byte address 0x4 - core index']
  #allocation1 [shape = 'u32[144,128]{1,0:T(1,128)}', space=vmem, size = 0x12000, scoped, tag = 'internal scratch']
  %s0 = inlined_call_operand.vmem [shape: f32[16,16], index: 0, kind: input, shape index: {}]
  %s1 = inlined_call_operand.vmem [shape: bf16[16,32], index: 1, kind: input, shape index: {}]
  %s2 = inlined_call_operand.vmem [shape: f32[1,32], index: 2, kind: input, shape index: {}]
  %s3 = inlined_call_operand.vmem [shape: bf16[32,128], index: 3, kind: input, shape index: {}]
  %s4 = inlined_call_operand.vmem [shape: f32[1,128], index: 4, kind: input, shape index: {}]
  %s5 = inlined_call_operand.vmem [shape: f32[16,128], index: 5, kind: output, shape index: {}]
  %s6 = sld [smem:[#allocation0]]
  $region30: #{forward.3} parent=0
    _
  %s8 = ssub.s32 1, %s6
  %s9 = scalar_select 0, %s8, %s6
  // Predicated region
  $region2: #{forward.3} parent=0 // pred_check
    _
  $region3: #{forward.3} parent=0 // pred_check_branch
    %11 = sbr.rel (0) target = $region5
  $region4: #{forward.3} parent=0 // pred_region
    _
  $region5: #{forward.3} parent=0 // pred_fallthru
    _
  // Predicated region
  $region6: #{forward.3} parent=0 // pred_check
    _
  $region7: #{forward.3} parent=0 // pred_check_branch
    %13 = sbr.rel (0) target = $region9
  $region8: #{forward.3} parent=0 // pred_region
    _
  $region9: #{forward.3} parent=0 // pred_fallthru
    _
  // Predicated region
  $region10: #{forward.3} parent=0 // pred_check
    _
  $region11: #{forward.3} parent=0 // pred_check_branch
    %15 = sbr.rel (0) target = $region13
  $region12: #{forward.3} parent=0 // pred_region
    _
  $region13: #{forward.3} parent=0 // pred_fallthru
    _
  // Predicated region
  $region14: #{forward.3} parent=0 // pred_check
    _
  $region15: #{forward.3} parent=0 // pred_check_branch
    %17 = sbr.rel (0) target = $region17
  $region16: #{forward.3} parent=0 // pred_region
    _
  $region17: #{forward.3} parent=0 // pred_fallthru
    _
  // Predicated region
  $region18: #{forward.3} parent=0 // pred_check
    _
  $region19: #{forward.3} parent=0 // pred_check_branch
    %19 = sbr.rel (0) target = $region21
  $region20: #{forward.3} parent=0 // pred_region
    _
  $region21: #{forward.3} parent=0 // pred_fallthru
    _
  %v21 = vld [vmem:[%s0] sm:$0xff]
  %v22 = vld [vmem:[%s0 + $0x8] sm:$0xff]
  %v23 = vpack.c.bf16 %v22, %v21
  %v24 = vld [vmem:[%s1] sm:$0xf]
  %v25 = vld [vmem:[%s1 + $0x4] sm:$0xf]
  %v26 = vld [vmem:[%s2] sm:$0x1]
  %v28 = vlaneseq
  %v29 = vshrl.u32 %v28, 7
  %v30 = vsub.s32 0, %v29
  %v31 = vrot.slane %v26, %v30
  %v35 = vunpack.c.l.b16 %v24
  %v36 = vunpack.c.l.b16 %v25
  %v37 = vpack.c.b16 %v36, %v35
  %vm39 = vcmask 130048
  %v41 = vsel %vm39, %v23, 0
  %43 = vmatprep.subr.bf16.mxu0 0
  %44 = vmatpush1.bf16.msra.mxu0 0
  %45 = vmatprep.subr.bf16.mxu0 0
  %46 = vmatpush1.bf16.msra.mxu0 0
  %47 = vmatprep.subr.bf16.mxu0 0
  %48 = vmatpush1.bf16.msra.mxu0 0
  %49 = vmatprep.subr.bf16.mxu0 0
  %50 = vmatpush1.bf16.msra.mxu0 0
  %51 = vmatprep.subr.bf16.mxu0 0
  %52 = vmatpush1.bf16.msra.mxu0 0
  %53 = vmatprep.subr.bf16.mxu0 0
  %54 = vmatpush1.bf16.msra.mxu0 0
  %55 = vmatprep.subr.bf16.mxu0 0
  %56 = vmatpush1.bf16.msra.mxu0 0
  %57 = vmatprep.subr.bf16.mxu0 0
  %58 = vmatpush1.bf16.msra.mxu0 %v37
  %59 = vmatprep.subr.bf16.mxu0 0
  %60 = vmatpush2.bf16.msra.mxu0 0
  %61 = vmatprep.subr.bf16.mxu0 0
  %62 = vmatpush2.bf16.msra.mxu0 0
  %63 = vmatprep.subr.bf16.mxu0 0
  %64 = vmatpush2.bf16.msra.mxu0 0
  %65 = vmatprep.subr.bf16.mxu0 0
  %66 = vmatpush2.bf16.msra.mxu0 0
  %67 = vmatprep.subr.bf16.mxu0 0
  %68 = vmatpush2.bf16.msra.mxu0 0
  %69 = vmatprep.subr.bf16.mxu0 0
  %70 = vmatpush2.bf16.msra.mxu0 0
  %71 = vmatprep.subr.bf16.mxu0 0
  %72 = vmatpush2.bf16.msra.mxu0 0
  %73 = vmatprep.subr.bf16.mxu0 0
  %74 = vmatpush2.bf16.msra.mxu0 0
  %75 = vmatprep.mubr.bf16.mxu0 0
  %76 = vmatmul.mubr.bf16.gmra.mxu0 %v41
  %v77 = vpop.f32.mrf.mxu0
  %v78 = vadd.f32 %v31, %v77
  %v79 = vpop.f32.mrf.mxu0
  %v80 = vpop.f32.mrf.mxu0
  %v81 = vadd.f32 %v31, %v80
  %v82 = vpop.f32.mrf.mxu0
  %83 = vdwg.mxu0
  %v84 = vmax.f32 %v78, 0.0
  %v85 = vmax.f32 %v81, 0.0
  %v86 = vpack.c.bf16 %v85, %v84
  %v87 = vld [vmem:[%s3] sm:$0xf]
  %v88 = vld [vmem:[%s3 + $0x4] sm:$0xf]
  %v89 = vld [vmem:[%s3 + $0x8] sm:$0xf]
  %v90 = vld [vmem:[%s3 + $0xc] sm:$0xf]
  %v91 = vld [vmem:[%s4] sm:$0x1]
  %v93 = vlaneseq
  %v94 = vshrl.u32 %v93, 7
  %v95 = vsub.s32 0, %v94
  %v96 = vrot.slane %v91, %v95
  %v102 = vunpack.c.l.b16 %v87
  %v103 = vunpack.c.l.b16 %v88
  %v104 = vunpack.c.l.b16 %v89
  %v105 = vunpack.c.l.b16 %v90
  %v106 = vpack.c.b16 %v103, %v102
  %v107 = vpack.c.b16 %v105, %v104
  %vm110 = vcmask 261120
  %v112 = vsel %vm110, %v86, 0
  %114 = vmatprep.subr.bf16.mxu0 0
  %115 = vmatpush1.bf16.msra.mxu0 0
  %116 = vmatprep.subr.bf16.mxu0 0
  %117 = vmatpush1.bf16.msra.mxu0 0
  %118 = vmatprep.subr.bf16.mxu0 0
  %119 = vmatpush1.bf16.msra.mxu0 0
  %120 = vmatprep.subr.bf16.mxu0 0
  %121 = vmatpush1.bf16.msra.mxu0 0
  %122 = vmatprep.subr.bf16.mxu0 0
  %123 = vmatpush1.bf16.msra.mxu0 0
  %124 = vmatprep.subr.bf16.mxu0 0
  %125 = vmatpush1.bf16.msra.mxu0 0
  %126 = vmatprep.subr.bf16.mxu0 0
  %127 = vmatpush1.bf16.msra.mxu0 %v107
  %128 = vmatprep.subr.bf16.mxu0 0
  %129 = vmatpush1.bf16.msra.mxu0 %v106
  %130 = vmatprep.subr.bf16.mxu0 0
  %131 = vmatpush2.bf16.msra.mxu0 0
  %132 = vmatprep.subr.bf16.mxu0 0
  %133 = vmatpush2.bf16.msra.mxu0 0
  %134 = vmatprep.subr.bf16.mxu0 0
  %135 = vmatpush2.bf16.msra.mxu0 0
  %136 = vmatprep.subr.bf16.mxu0 0
  %137 = vmatpush2.bf16.msra.mxu0 0
  %138 = vmatprep.subr.bf16.mxu0 0
  %139 = vmatpush2.bf16.msra.mxu0 0
  %140 = vmatprep.subr.bf16.mxu0 0
  %141 = vmatpush2.bf16.msra.mxu0 0
  %142 = vmatprep.subr.bf16.mxu0 0
  %143 = vmatpush2.bf16.msra.mxu0 0
  %144 = vmatprep.subr.bf16.mxu0 0
  %145 = vmatpush2.bf16.msra.mxu0 0
  %146 = vmatprep.mubr.bf16.mxu0 0
  %147 = vmatmul.mubr.bf16.gmra.mxu0 %v112
  %v148 = vpop.f32.mrf.mxu0
  %v149 = vadd.f32 %v96, %v148
  %v150 = vpop.f32.mrf.mxu0
  %v151 = vpop.f32.mrf.mxu0
  %v152 = vadd.f32 %v96, %v151
  %v153 = vpop.f32.mrf.mxu0
  %154 = vdwg.mxu0
  %v155 = vmax.f32 %v149, 0.0
  %v156 = vmax.f32 %v152, 0.0
  %157 = vst [vmem:[%s5] sm:$0xff] %v155
  %158 = vst [vmem:[%s5 + $0x8] sm:$0xff] %v156
  // Predicated region
  $region22: #{forward.3} parent=0 // pred_check
    _
  $region23: #{forward.3} parent=0 // pred_check_branch
    %160 = sbr.rel (0) target = $region25
  $region24: #{forward.3} parent=0 // pred_region
    _
  $region25: #{forward.3} parent=0 // pred_fallthru
    _
  // Predicated region
  $region26: #{forward.3} parent=0 // pred_check
    _
  $region27: #{forward.3} parent=0 // pred_check_branch
    %162 = sbr.rel (0) target = $region29
  $region28: #{forward.3} parent=0 // pred_region
    _
  $region29: #{forward.3} parent=0 // pred_fallthru
    _

// kernel: forward.5
$region0: #{forward.5}
  #allocation0 [shape = 'u32[]', space=smem, size = 0x4, offset = 0x4, fixed_abs, tag = 'smem constant byte address 0x4 - core index']
  #allocation1 [shape = 'u32[144,128]{1,0:T(1,128)}', space=vmem, size = 0x12000, scoped, tag = 'internal scratch']
  %s0 = inlined_call_operand.vmem [shape: f32[16,128], index: 0, kind: input, shape index: {}]
  %s1 = inlined_call_operand.vmem [shape: f32[16,256], index: 1, kind: input, shape index: {}]
  %s2 = inlined_call_operand.vmem [shape: f32[1,128], index: 2, kind: input, shape index: {}]
  %s3 = inlined_call_operand.vmem [shape: f32[256,128], index: 3, kind: input, shape index: {}]
  %s4 = inlined_call_operand.vmem [shape: f32[16,128], index: 4, kind: output, shape index: {}]
  %s5 = sld [smem:[#allocation0]]
  $region26: #{forward.5} parent=0
    _
  %s7 = ssub.s32 1, %s5
  %s8 = scalar_select 0, %s7, %s5
  // Predicated region
  $region2: #{forward.5} parent=0 // pred_check
    _
  $region3: #{forward.5} parent=0 // pred_check_branch
    %10 = sbr.rel (0) target = $region5
  $region4: #{forward.5} parent=0 // pred_region
    _
  $region5: #{forward.5} parent=0 // pred_fallthru
    _
  // Predicated region
  $region6: #{forward.5} parent=0 // pred_check
    _
  $region7: #{forward.5} parent=0 // pred_check_branch
    %12 = sbr.rel (0) target = $region9
  $region8: #{forward.5} parent=0 // pred_region
    _
  $region9: #{forward.5} parent=0 // pred_fallthru
    _
  // Predicated region
  $region10: #{forward.5} parent=0 // pred_check
    _
  $region11: #{forward.5} parent=0 // pred_check_branch
    %14 = sbr.rel (0) target = $region13
  $region12: #{forward.5} parent=0 // pred_region
    _
  $region13: #{forward.5} parent=0 // pred_fallthru
    _
  // Predicated region
  $region14: #{forward.5} parent=0 // pred_check
    _
  $region15: #{forward.5} parent=0 // pred_check_branch
    %16 = sbr.rel (0) target = $region17
  $region16: #{forward.5} parent=0 // pred_region
    _
  $region17: #{forward.5} parent=0 // pred_fallthru
    _
  %v17 = vld [vmem:[%s0] sm:$0xff]
  %v18 = vld [vmem:[%s0 + $0x8] sm:$0xff]
  %v19 = vld [vmem:[%s2] sm:$0x1]
  %v21 = vlaneseq
  %v22 = vshrl.u32 %v21, 7
  %v23 = vsub.s32 0, %v22
  %v24 = vrot.slane %v19, %v23
  %v26 = vmul.f32 %v17, %v24
  %v27 = vmul.f32 %v18, %v24
  %v28 = vld [vmem:[%s1] sm:$0xff]
  %v29 = vld [vmem:[%s1 + $0x8] sm:$0xff]
  %v30 = vld [vmem:[%s1 + $0x10] sm:$0xff]
  %v31 = vld [vmem:[%s1 + $0x18] sm:$0xff]
  %v32 = vld [vmem:[%s3] sm:$0xff]
  %v33 = vld [vmem:[%s3 + $0x8] sm:$0xff]
  %v34 = vld [vmem:[%s3 + $0x10] sm:$0xff]
  %v35 = vld [vmem:[%s3 + $0x18] sm:$0xff]
  %v36 = vld [vmem:[%s3 + $0x20] sm:$0xff]
  %v37 = vld [vmem:[%s3 + $0x28] sm:$0xff]
  %v38 = vld [vmem:[%s3 + $0x30] sm:$0xff]
  %v39 = vld [vmem:[%s3 + $0x38] sm:$0xff]
  %v40 = vld [vmem:[%s3 + $0x40] sm:$0xff]
  %v41 = vld [vmem:[%s3 + $0x48] sm:$0xff]
  %v42 = vld [vmem:[%s3 + $0x50] sm:$0xff]
  %v43 = vld [vmem:[%s3 + $0x58] sm:$0xff]
  %v44 = vld [vmem:[%s3 + $0x60] sm:$0xff]
  %v45 = vld [vmem:[%s3 + $0x68] sm:$0xff]
  %v46 = vld [vmem:[%s3 + $0x70] sm:$0xff]
  %v47 = vld [vmem:[%s3 + $0x78] sm:$0xff]
  %v48 = vld [vmem:[%s3 + $0x80] sm:$0xff]
  %v49 = vld [vmem:[%s3 + $0x88] sm:$0xff]
  %v50 = vld [vmem:[%s3 + $0x90] sm:$0xff]
  %v51 = vld [vmem:[%s3 + $0x98] sm:$0xff]
  %v52 = vld [vmem:[%s3 + $0xa0] sm:$0xff]
  %v53 = vld [vmem:[%s3 + $0xa8] sm:$0xff]
  %v54 = vld [vmem:[%s3 + $0xb0] sm:$0xff]
  %v55 = vld [vmem:[%s3 + $0xb8] sm:$0xff]
  %v56 = vld [vmem:[%s3 + $0xc0] sm:$0xff]
  %v57 = vld [vmem:[%s3 + $0xc8] sm:$0xff]
  %v58 = vld [vmem:[%s3 + $0xd0] sm:$0xff]
  %v59 = vld [vmem:[%s3 + $0xd8] sm:$0xff]
  %v60 = vld [vmem:[%s3 + $0xe0] sm:$0xff]
  %v61 = vld [vmem:[%s3 + $0xe8] sm:$0xff]
  %v62 = vld [vmem:[%s3 + $0xf0] sm:$0xff]
  %v63 = vld [vmem:[%s3 + $0xf8] sm:$0xff]
  %64 = vmatprep.subr.mxu0 0.0
  %65 = vmatpush1.msra.mxu0 %v47
  %66 = vmatprep.subr.mxu0 0.0
  %67 = vmatpush1.msra.mxu0 %v46
  %68 = vmatprep.subr.mxu0 0.0
  %69 = vmatpush1.msra.mxu0 %v45
  %70 = vmatprep.subr.mxu0 0.0
  %71 = vmatpush1.msra.mxu0 %v44
  %72 = vmatprep.subr.mxu0 0.0
  %73 = vmatpush1.msra.mxu0 %v43
  %74 = vmatprep.subr.mxu0 0.0
  %75 = vmatpush1.msra.mxu0 %v42
  %76 = vmatprep.subr.mxu0 0.0
  %77 = vmatpush1.msra.mxu0 %v41
  %78 = vmatprep.subr.mxu0 0.0
  %79 = vmatpush1.msra.mxu0 %v40
  %80 = vmatprep.subr.mxu0 0.0
  %81 = vmatpush1.msra.mxu0 %v39
  %82 = vmatprep.subr.mxu0 0.0
  %83 = vmatpush1.msra.mxu0 %v38
  %84 = vmatprep.subr.mxu0 0.0
  %85 = vmatpush1.msra.mxu0 %v37
  %86 = vmatprep.subr.mxu0 0.0
  %87 = vmatpush1.msra.mxu0 %v36
  %88 = vmatprep.subr.mxu0 0.0
  %89 = vmatpush1.msra.mxu0 %v35
  %90 = vmatprep.subr.mxu0 0.0
  %91 = vmatpush1.msra.mxu0 %v34
  %92 = vmatprep.subr.mxu0 0.0
  %93 = vmatpush1.msra.mxu0 %v33
  %94 = vmatprep.subr.mxu0 0.0
  %95 = vmatpush1.msra.mxu0 %v32
  %96 = vmatprep.subr.mxu0 0.0
  %97 = vmatpush2.msra.mxu0 %v63
  %98 = vmatprep.subr.mxu0 0.0
  %99 = vmatpush2.msra.mxu0 %v62
  %100 = vmatprep.subr.mxu0 0.0
  %101 = vmatpush2.msra.mxu0 %v61
  %102 = vmatprep.subr.mxu0 0.0
  %103 = vmatpush2.msra.mxu0 %v60
  %104 = vmatprep.subr.mxu0 0.0
  %105 = vmatpush2.msra.mxu0 %v59
  %106 = vmatprep.subr.mxu0 0.0
  %107 = vmatpush2.msra.mxu0 %v58
  %108 = vmatprep.subr.mxu0 0.0
  %109 = vmatpush2.msra.mxu0 %v57
  %110 = vmatprep.subr.mxu0 0.0
  %111 = vmatpush2.msra.mxu0 %v56
  %112 = vmatprep.subr.mxu0 0.0
  %113 = vmatpush2.msra.mxu0 %v55
  %114 = vmatprep.subr.mxu0 0.0
  %115 = vmatpush2.msra.mxu0 %v54
  %116 = vmatprep.subr.mxu0 0.0
  %117 = vmatpush2.msra.mxu0 %v53
  %118 = vmatprep.subr.mxu0 0.0
  %119 = vmatpush2.msra.mxu0 %v52
  %120 = vmatprep.subr.mxu0 0.0
  %121 = vmatpush2.msra.mxu0 %v51
  %122 = vmatprep.subr.mxu0 0.0
  %123 = vmatpush2.msra.mxu0 %v50
  %124 = vmatprep.subr.mxu0 0.0
  %125 = vmatpush2.msra.mxu0 %v49
  %126 = vmatprep.subr.mxu0 0.0
  %127 = vmatpush2.msra.mxu0 %v48
  %128 = vmatprep.mubr.f32.mxu0 %v29
  %129 = vmatmul.mubr.f32.gmra.mxu0 %v28
  %v130 = vpop.f32.mrf.mxu0
  %v131 = vadd.f32 0.0, %v130
  %v132 = vpop.f32.mrf.mxu0
  %133 = vmatprep.mubr.f32.mxu0 %v31
  %134 = vmatmul.mubr.f32.gmra.mxu0 %v30
  %v135 = vpop.f32.mrf.mxu0
  %v136 = vadd.f32 0.0, %v135
  %v137 = vpop.f32.mrf.mxu0
  %138 = vdwg.mxu0
  %v139 = vadd.f32 %v26, %v131
  %v140 = vadd.f32 %v27, %v136
  %141 = vadd.xlane.f32.xlu0 %v139
  %v142 = vpop.xlane.xlu0 %141
  %143 = vadd.xlane.f32.xlu0 %v140
  %v144 = vpop.xlane.xlu0 %143
  %vm145 = vcmp.gt.f32.partialorder %v142, 0.0
  %vm146 = vcmp.gt.f32.partialorder %v144, 0.0
  %v147 = vrcp.pop %v142
  %v148 = vmul.f32 1000.0, %v147
  %v149 = vrcp.pop %v144
  %v150 = vmul.f32 1000.0, %v149
  %v151 = vsel %vm145, %v148, 0.0
  %v152 = vsel %vm146, %v150, 0.0
  %v153 = vmul.f32 %v139, %v151
  %v154 = vmul.f32 %v140, %v152
  %155 = vst [vmem:[%s4] sm:$0xff] %v153
  %156 = vst [vmem:[%s4 + $0x8] sm:$0xff] %v154
  // Predicated region
  $region18: #{forward.5} parent=0 // pred_check
    _
  $region19: #{forward.5} parent=0 // pred_check_branch
    %158 = sbr.rel (0) target = $region21
  $region20: #{forward.5} parent=0 // pred_region
    _
  $region21: #{forward.5} parent=0 // pred_fallthru
    _
  // Predicated region
  $region22: #{forward.5} parent=0 // pred_check
    _
  $region23: #{forward.5} parent=0 // pred_check_branch
    %160 = sbr.rel (0) target = $region25
  $region24: #{forward.5} parent=0 // pred_region
    _
  $region25: #{forward.5} parent=0 // pred_fallthru
    _

// kernel: forward.4
$region0: #{forward.4}
  #allocation0 [shape = 'u32[]', space=smem, size = 0x4, offset = 0x4, fixed_abs, tag = 'smem constant byte address 0x4 - core index']
  #allocation1 [shape = 'u32[144,128]{1,0:T(1,128)}', space=vmem, size = 0x12000, scoped, tag = 'internal scratch']
  %s0 = inlined_call_operand.vmem [shape: f32[16,128], index: 0, kind: input, shape index: {}]
  %s1 = inlined_call_operand.vmem [shape: f32[16,8], index: 1, kind: input, shape index: {}]
  %s2 = inlined_call_operand.hbm [shape: bf16[2,128,128], index: 2, kind: input, shape index: {}]
  %s3 = inlined_call_operand.vmem [shape: bf16[2,8,128], index: 3, kind: input, shape index: {}]
  %s4 = inlined_call_operand.vmem [shape: f32[2,3,128], index: 4, kind: input, shape index: {}]
  %s5 = inlined_call_operand.vmem [shape: f32[2,3,128], index: 5, kind: input, shape index: {}]
  %s6 = inlined_call_operand.hbm [shape: bf16[2,2,128,128], index: 6, kind: input, shape index: {}]
  %s7 = inlined_call_operand.vmem [shape: bf16[2,128,128], index: 7, kind: input, shape index: {}]
  %s8 = inlined_call_operand.vmem [shape: f32[2,1,128], index: 8, kind: input, shape index: {}]
  %s9 = inlined_call_operand.vmem [shape: f32[16,256], index: 9, kind: output, shape index: {}]
  %s10 = sld [smem:[#allocation0]]
  $region111: #{forward.4} parent=0
    _
  %s12 = ssub.s32 1, %s10
  %s13 = scalar_select 0, %s12, %s10
  $region1: #{forward.4} parent=0
    #allocation2 [shape = 'u8[65536]{0}', space=vmem, size = 0x10000, scoped, tag = 'input window, operand 2']
    #allocation3 [shape = 's32[2]{0}', space=sflag, size = 0x8, scoped, tag = 'scoped memory for forward.4']
    #allocation4 [shape = 'u8[131072]{0}', space=vmem, size = 0x20000, scoped, tag = 'input window, operand 6']
    #allocation5 [shape = 's32[2]{0}', space=sflag, size = 0x8, scoped, tag = 'scoped memory for forward.4']
    #allocation6 [shape = 'u8[16384]{0}', space=vmem, size = 0x4000, scoped, tag = 'output window, operand 0']
    %14 = vsyncpa [#allocation3], 0
    %s15 = scalar_lea.sflag [#allocation3], 1
    %16 = vsyncpa %s15, 0
    %17 = vsyncpa [#allocation5], 0
    %s18 = scalar_lea.sflag [#allocation5], 1
    %19 = vsyncpa %s18, 0
    loop: start=0, step=1, limit=4
    $region2: #{forward.4} parent=1 // loop_pre_header
      _
    $region3: #{forward.4} parent=1 // loop_header
      %s21 = sphi 0, %s25
      %p22 = scmp.ge.s32.totalorder %s21, 4
      %s29 = sphi 0, %s29
      %s31 = sphi 0, %s29
      %s32 = sphi 0, %s31
      %s46 = sphi 0, %s32
      %s50 = sphi 0, %s50
      %s52 = sphi 0, %s50
      %s53 = sphi 0, %s52
      %s67 = sphi 0, %s53
      %s73 = sphi 0, %s75
      %s76 = sphi 0, %s73
      %s77 = sphi 0, %s76
      %s93 = sphi 0, %s77
      %s99 = sphi 0, %s101
      %s102 = sphi 0, %s99
      %s103 = sphi 0, %s102
      %s119 = sphi 0, %s103
      %s125 = sphi 0, %s127
      %s128 = sphi 0, %s125
      %s129 = sphi 0, %s128
      %s145 = sphi 0, %s129
      %s151 = sphi 0, %s153
      %s154 = sphi 0, %s151
      %s155 = sphi 0, %s154
      %s171 = sphi 0, %s155
      %s177 = sphi 0, %s179
      %s180 = sphi 0, %s177
      %s181 = sphi 0, %s180
      %s197 = sphi 0, %s181
      %s203 = sphi 0, %s205
      %s206 = sphi 0, %s203
      %s207 = sphi 0, %s206
      %s223 = sphi 0, %s207
      %s229 = sphi 0, %s231
      %s232 = sphi 0, %s229
      %s233 = sphi 0, %s232
      %s249 = sphi 0, %s233
      %s255 = sphi 0, %s257
      %s258 = sphi 0, %s255
      %s259 = sphi 0, %s258
      %s275 = sphi 0, %s259
    $region4: #{forward.4} parent=1 // loop_header_branch
      %24 = sbr.rel (%p22) target = $region8
    $region5: #{forward.4} parent=1 // loop_body
      %s26 = ssub.s32 %s21, 1
      %s27 = ssub.s32 %s21, 2
      %s28 = sadd.s32 %s21, 1
      %s30 = sadd.s32 %s29, 1
      %p33 = scmp.eq.s32.totalorder %s21, 1
      %p34 = scmp.ne.s32.totalorder %s29, %s31
      %p35 = scmp.eq.s32.totalorder %s21, 0
      %p36 = por %p34, %p35
      %p37 = scmp.ne.s32.totalorder %s29, %s31
      %p38 = scmp.eq.s32.totalorder %s26, 1
      %p39 = por %p37, %p38
      %p40 = scmp.ne.s32.totalorder %s31, %s32
      %p41 = scmp.eq.s32.totalorder %s26, 0
      %p42 = por %p40, %p41
      %p43 = scmp.ne.s32.totalorder %s31, %s32
      %p44 = scmp.eq.s32.totalorder %s27, 1
      %p45 = por %p43, %p44
      %p47 = scmp.ne.s32.totalorder %s32, %s46
      %p48 = scmp.eq.s32.totalorder %s27, 0
      %p49 = por %p47, %p48
      %s51 = sadd.s32 %s50, 1
      %p54 = scmp.eq.s32.totalorder %s21, 1
      %p55 = scmp.ne.s32.totalorder %s50, %s52
      %p56 = scmp.eq.s32.totalorder %s21, 0
      %p57 = por %p55, %p56
      %p58 = scmp.ne.s32.totalorder %s50, %s52
      %p59 = scmp.eq.s32.totalorder %s26, 1
      %p60 = por %p58, %p59
      %p61 = scmp.ne.s32.totalorder %s52, %s53
      %p62 = scmp.eq.s32.totalorder %s26, 0
      %p63 = por %p61, %p62
      %p64 = scmp.ne.s32.totalorder %s52, %s53
      %p65 = scmp.eq.s32.totalorder %s27, 1
      %p66 = por %p64, %p65
      %p68 = scmp.ne.s32.totalorder %s53, %s67
      %p69 = scmp.eq.s32.totalorder %s27, 0
      %p70 = por %p68, %p69
      %s71 = ssub.s32 %s21, %s28
      %p72 = scmp.eq.s32.totalorder %s71, 0
      %s74 = sadd.s32 %s73, 1
      %s75 = scalar_select %p72, %s73, %s74
      %p78 = pneg %p72
      %p79 = scmp.eq.s32.totalorder %s21, 1
      %p80 = por %p78, %p79
      %p81 = scmp.ne.s32.totalorder %s73, %s76
      %p82 = scmp.eq.s32.totalorder %s21, 0
      %p83 = por %p81, %p82
      %p84 = scmp.ne.s32.totalorder %s73, %s76
      %p85 = scmp.eq.s32.totalorder %s26, 1
      %p86 = por %p84, %p85
      %p87 = scmp.ne.s32.totalorder %s76, %s77
      %p88 = scmp.eq.s32.totalorder %s26, 0
      %p89 = por %p87, %p88
      %p90 = scmp.ne.s32.totalorder %s76, %s77
      %p91 = scmp.eq.s32.totalorder %s27, 1
      %p92 = por %p90, %p91
      %p94 = scmp.ne.s32.totalorder %s77, %s93
      %p95 = scmp.eq.s32.totalorder %s27, 0
      %p96 = por %p94, %p95
      %s97 = ssub.s32 %s21, %s28
      %p98 = scmp.eq.s32.totalorder %s97, 0
      %s100 = sadd.s32 %s99, 1
      %s101 = scalar_select %p98, %s99, %s100
      %p104 = pneg %p98
      %p105 = scmp.eq.s32.totalorder %s21, 1
      %p106 = por %p104, %p105
      %p107 = scmp.ne.s32.totalorder %s99, %s102
      %p108 = scmp.eq.s32.totalorder %s21, 0
      %p109 = por %p107, %p108
      %p110 = scmp.ne.s32.totalorder %s99, %s102
      %p111 = scmp.eq.s32.totalorder %s26, 1
      %p112 = por %p110, %p111
      %p113 = scmp.ne.s32.totalorder %s102, %s103
      %p114 = scmp.eq.s32.totalorder %s26, 0
      %p115 = por %p113, %p114
      %p116 = scmp.ne.s32.totalorder %s102, %s103
      %p117 = scmp.eq.s32.totalorder %s27, 1
      %p118 = por %p116, %p117
      %p120 = scmp.ne.s32.totalorder %s103, %s119
      %p121 = scmp.eq.s32.totalorder %s27, 0
      %p122 = por %p120, %p121
      %s123 = ssub.s32 %s21, %s28
      %p124 = scmp.eq.s32.totalorder %s123, 0
      %s126 = sadd.s32 %s125, 1
      %s127 = scalar_select %p124, %s125, %s126
      %p130 = pneg %p124
      %p131 = scmp.eq.s32.totalorder %s21, 1
      %p132 = por %p130, %p131
      %p133 = scmp.ne.s32.totalorder %s125, %s128
      %p134 = scmp.eq.s32.totalorder %s21, 0
      %p135 = por %p133, %p134
      %p136 = scmp.ne.s32.totalorder %s125, %s128
      %p137 = scmp.eq.s32.totalorder %s26, 1
      %p138 = por %p136, %p137
      %p139 = scmp.ne.s32.totalorder %s128, %s129
      %p140 = scmp.eq.s32.totalorder %s26, 0
      %p141 = por %p139, %p140
      %p142 = scmp.ne.s32.totalorder %s128, %s129
      %p143 = scmp.eq.s32.totalorder %s27, 1
      %p144 = por %p142, %p143
      %p146 = scmp.ne.s32.totalorder %s129, %s145
      %p147 = scmp.eq.s32.totalorder %s27, 0
      %p148 = por %p146, %p147
      %s149 = ssub.s32 %s21, %s28
      %p150 = scmp.eq.s32.totalorder %s149, 0
      %s152 = sadd.s32 %s151, 1
      %s153 = scalar_select %p150, %s151, %s152
      %p156 = pneg %p150
      %p157 = scmp.eq.s32.totalorder %s21, 1
      %p158 = por %p156, %p157
      %p159 = scmp.ne.s32.totalorder %s151, %s154
      %p160 = scmp.eq.s32.totalorder %s21, 0
      %p161 = por %p159, %p160
      %p162 = scmp.ne.s32.totalorder %s151, %s154
      %p163 = scmp.eq.s32.totalorder %s26, 1
      %p164 = por %p162, %p163
      %p165 = scmp.ne.s32.totalorder %s154, %s155
      %p166 = scmp.eq.s32.totalorder %s26, 0
      %p167 = por %p165, %p166
      %p168 = scmp.ne.s32.totalorder %s154, %s155
      %p169 = scmp.eq.s32.totalorder %s27, 1
      %p170 = por %p168, %p169
      %p172 = scmp.ne.s32.totalorder %s155, %s171
      %p173 = scmp.eq.s32.totalorder %s27, 0
      %p174 = por %p172, %p173
      %s175 = ssub.s32 %s21, %s28
      %p176 = scmp.eq.s32.totalorder %s175, 0
      %s178 = sadd.s32 %s177, 1
      %s179 = scalar_select %p176, %s177, %s178
      %p182 = pneg %p176
      %p183 = scmp.eq.s32.totalorder %s21, 1
      %p184 = por %p182, %p183
      %p185 = scmp.ne.s32.totalorder %s177, %s180
      %p186 = scmp.eq.s32.totalorder %s21, 0
      %p187 = por %p185, %p186
      %p188 = scmp.ne.s32.totalorder %s177, %s180
      %p189 = scmp.eq.s32.totalorder %s26, 1
      %p190 = por %p188, %p189
      %p191 = scmp.ne.s32.totalorder %s180, %s181
      %p192 = scmp.eq.s32.totalorder %s26, 0
      %p193 = por %p191, %p192
      %p194 = scmp.ne.s32.totalorder %s180, %s181
      %p195 = scmp.eq.s32.totalorder %s27, 1
      %p196 = por %p194, %p195
      %p198 = scmp.ne.s32.totalorder %s181, %s197
      %p199 = scmp.eq.s32.totalorder %s27, 0
      %p200 = por %p198, %p199
      %s201 = ssub.s32 %s21, %s28
      %p202 = scmp.eq.s32.totalorder %s201, 0
      %s204 = sadd.s32 %s203, 1
      %s205 = scalar_select %p202, %s203, %s204
      %p208 = pneg %p202
      %p209 = scmp.eq.s32.totalorder %s21, 1
      %p210 = por %p208, %p209
      %p211 = scmp.ne.s32.totalorder %s203, %s206
      %p212 = scmp.eq.s32.totalorder %s21, 0
      %p213 = por %p211, %p212
      %p214 = scmp.ne.s32.totalorder %s203, %s206
      %p215 = scmp.eq.s32.totalorder %s26, 1
      %p216 = por %p214, %p215
      %p217 = scmp.ne.s32.totalorder %s206, %s207
      %p218 = scmp.eq.s32.totalorder %s26, 0
      %p219 = por %p217, %p218
      %p220 = scmp.ne.s32.totalorder %s206, %s207
      %p221 = scmp.eq.s32.totalorder %s27, 1
      %p222 = por %p220, %p221
      %p224 = scmp.ne.s32.totalorder %s207, %s223
      %p225 = scmp.eq.s32.totalorder %s27, 0
      %p226 = por %p224, %p225
      %s227 = ssub.s32 %s21, %s28
      %p228 = scmp.eq.s32.totalorder %s227, 0
      %s230 = sadd.s32 %s229, 1
      %s231 = scalar_select %p228, %s229, %s230
      %p234 = pneg %p228
      %p235 = scmp.eq.s32.totalorder %s21, 1
      %p236 = por %p234, %p235
      %p237 = scmp.ne.s32.totalorder %s229, %s232
      %p238 = scmp.eq.s32.totalorder %s21, 0
      %p239 = por %p237, %p238
      %p240 = scmp.ne.s32.totalorder %s229, %s232
      %p241 = scmp.eq.s32.totalorder %s26, 1
      %p242 = por %p240, %p241
      %p243 = scmp.ne.s32.totalorder %s232, %s233
      %p244 = scmp.eq.s32.totalorder %s26, 0
      %p245 = por %p243, %p244
      %p246 = scmp.ne.s32.totalorder %s232, %s233
      %p247 = scmp.eq.s32.totalorder %s27, 1
      %p248 = por %p246, %p247
      %p250 = scmp.ne.s32.totalorder %s233, %s249
      %p251 = scmp.eq.s32.totalorder %s27, 0
      %p252 = por %p250, %p251
      %s253 = ssub.s32 %s21, %s28
      %p254 = scmp.eq.s32.totalorder %s253, 0
      %s256 = sadd.s32 %s255, 1
      %s257 = scalar_select %p254, %s255, %s256
      %p260 = pneg %p254
      %p261 = scmp.eq.s32.totalorder %s21, 1
      %p262 = por %p260, %p261
      %p263 = scmp.ne.s32.totalorder %s255, %s258
      %p264 = scmp.eq.s32.totalorder %s21, 0
      %p265 = por %p263, %p264
      %p266 = scmp.ne.s32.totalorder %s255, %s258
      %p267 = scmp.eq.s32.totalorder %s26, 1
      %p268 = por %p266, %p267
      %p269 = scmp.ne.s32.totalorder %s258, %s259
      %p270 = scmp.eq.s32.totalorder %s26, 0
      %p271 = por %p269, %p270
      %p272 = scmp.ne.s32.totalorder %s258, %s259
      %p273 = scmp.eq.s32.totalorder %s27, 1
      %p274 = por %p272, %p273
      %p276 = scmp.ne.s32.totalorder %s259, %s275
      %p277 = scmp.eq.s32.totalorder %s27, 0
      %p278 = por %p276, %p277
      %p279 = scmp.le.s32.totalorder 1, %s21
      %p280 = scmp.lt.s32.totalorder %s21, 3
      %p281 = pnand %p279, %p280
      %p282 = pneg %p281
      // Predicated region
      $region9: #{forward.4} parent=5 // pred_check
        _
      $region10: #{forward.4} parent=5 // pred_check_branch
        %284 = sbr.rel (%p281) target = $region12
      $region11: #{forward.4} parent=5 // pred_region
        %s285 = ssub.s32 %s21, 1
        // Predicated region
        $region13: #{forward.4} parent=11 // pred_check
          %p286 = pneg %p42
        $region14: #{forward.4} parent=11 // pred_check_branch
          %288 = sbr.rel (%p286) target = $region16
        $region15: #{forward.4} parent=11 // pred_region
          _
        $region16: #{forward.4} parent=11 // pred_fallthru
          _
        // Predicated region
        $region17: #{forward.4} parent=11 // pred_check
          %p289 = pneg %p63
        $region18: #{forward.4} parent=11 // pred_check_branch
          %291 = sbr.rel (%p289) target = $region20
        $region19: #{forward.4} parent=11 // pred_region
          _
        $region20: #{forward.4} parent=11 // pred_fallthru
          _
      $region12: #{forward.4} parent=5 // pred_fallthru
        _
      %p292 = scmp.lt.s32.totalorder %s21, 2
      // Predicated region
      $region21: #{forward.4} parent=5 // pred_check
        %p293 = pneg %p292
      $region22: #{forward.4} parent=5 // pred_check_branch
        %295 = sbr.rel (%p293) target = $region24
      $region23: #{forward.4} parent=5 // pred_region
        // Predicated region
        $region25: #{forward.4} parent=23 // pred_check
          %p296 = pneg %p83
        $region26: #{forward.4} parent=23 // pred_check_branch
          %298 = sbr.rel (%p296) target = $region28
        $region27: #{forward.4} parent=23 // pred_region
          %s299 = sand.u32 %s73, 1
          %s300 = scalar_lea.sflag [#allocation3], %s299
          %s301 = sand.u32 %s73, 1
          %s302 = smul.addr %s301, 64
          %s303 = scalar_lea.vmem [#allocation2], %s302
          %s305 = ssub.s32 1024, 1024
          %306 = vsyncadd %s300, %s305
          %s307 = smul.addr %s21, 16
          %s308 = smul.addr %s307, 64
          %s309 = scalar_lea.hbm %s2, %s308
          %s310 = sshll.u32 %s303, 4
          %s311 = int_to_ptr.vmem [resolvable:$true] %s310
          %316 = dma.hbm_to_vmem [thread:$0]  %s309, 1024, %s311, %s300, 64, 64, 4
        $region28: #{forward.4} parent=23 // pred_fallthru
          _
        // Predicated region
        $region29: #{forward.4} parent=23 // pred_check
          %p317 = pneg %p109
        $region30: #{forward.4} parent=23 // pred_check_branch
          %319 = sbr.rel (%p317) target = $region32
        $region31: #{forward.4} parent=23 // pred_region
          %p320 = scmp.lt.s32.totalorder %s21, 1
          %s321 = scalar_select %p320, %s21, 1
          %s322 = smul.addr %s321, 4
          %s323 = scalar_lea.vmem %s3, %s322
        $region32: #{forward.4} parent=23 // pred_fallthru
          _
        // Predicated region
        $region33: #{forward.4} parent=23 // pred_check
          %p324 = pneg %p135
        $region34: #{forward.4} parent=23 // pred_check_branch
          %326 = sbr.rel (%p324) target = $region36
        $region35: #{forward.4} parent=23 // pred_region
          %p327 = scmp.lt.s32.totalorder %s21, 1
          %s328 = scalar_select %p327, %s21, 1
          %s329 = smul.addr %s328, 4
          %s330 = scalar_lea.vmem %s4, %s329
        $region36: #{forward.4} parent=23 // pred_fallthru
          _
        // Predicated region
        $region37: #{forward.4} parent=23 // pred_check
          %p331 = pneg %p161
        $region38: #{forward.4} parent=23 // pred_check_branch
          %333 = sbr.rel (%p331) target = $region40
        $region39: #{forward.4} parent=23 // pred_region
          %p334 = scmp.lt.s32.totalorder %s21, 1
          %s335 = scalar_select %p334, %s21, 1
          %s336 = smul.addr %s335, 4
          %s337 = scalar_lea.vmem %s5, %s336
        $region40: #{forward.4} parent=23 // pred_fallthru
          _
        // Predicated region
        $region41: #{forward.4} parent=23 // pred_check
          %p338 = pneg %p187
        $region42: #{forward.4} parent=23 // pred_check_branch
          %340 = sbr.rel (%p338) target = $region44
        $region43: #{forward.4} parent=23 // pred_region
          %s341 = sand.u32 %s177, 1
          %s342 = scalar_lea.sflag [#allocation5], %s341
          %s343 = sand.u32 %s177, 1
          %s344 = smul.addr %s343, 128
          %s345 = scalar_lea.vmem [#allocation4], %s344
          %s347 = ssub.s32 2048, 2048
          %348 = vsyncadd %s342, %s347
          %s349 = smul.addr %s21, 32
          %s350 = smul.addr %s349, 64
          %s351 = scalar_lea.hbm %s6, %s350
          %s352 = sshll.u32 %s345, 4
          %s353 = int_to_ptr.vmem [resolvable:$true] %s352
          %358 = dma.hbm_to_vmem [thread:$0]  %s351, 2048, %s353, %s342, 64, 64, 4
        $region44: #{forward.4} parent=23 // pred_fallthru
          _
        // Predicated region
        $region45: #{forward.4} parent=23 // pred_check
          %p359 = pneg %p213
        $region46: #{forward.4} parent=23 // pred_check_branch
          %361 = sbr.rel (%p359) target = $region48
        $region47: #{forward.4} parent=23 // pred_region
          %p362 = scmp.lt.s32.totalorder %s21, 1
          %s363 = scalar_select %p362, %s21, 1
          %s364 = smul.addr %s363, 16
          %s365 = smul.addr %s364, 4
          %s366 = scalar_lea.vmem %s7, %s365
        $region48: #{forward.4} parent=23 // pred_fallthru
          _
        // Predicated region
        $region49: #{forward.4} parent=23 // pred_check
          %p367 = pneg %p239
        $region50: #{forward.4} parent=23 // pred_check_branch
          %369 = sbr.rel (%p367) target = $region52
        $region51: #{forward.4} parent=23 // pred_region
          %p370 = scmp.lt.s32.totalorder %s21, 1
          %s371 = scalar_select %p370, %s21, 1
          %s372 = scalar_lea.vmem %s8, %s371
        $region52: #{forward.4} parent=23 // pred_fallthru
          _
      $region24: #{forward.4} parent=5 // pred_fallthru
        _
      %p373 = scmp.le.s32.totalorder 1, %s21
      %p374 = scmp.lt.s32.totalorder %s21, 3
      %p375 = pnand %p373, %p374
      %p376 = pneg %p375
      // Predicated region
      $region53: #{forward.4} parent=5 // pred_check
        _
      $region54: #{forward.4} parent=5 // pred_check_branch
        %378 = sbr.rel (%p375) target = $region56
      $region55: #{forward.4} parent=5 // pred_region
        %s379 = ssub.s32 %s21, 1
        %s380 = sand.u32 %s76, 1
        %s381 = scalar_lea.sflag [#allocation3], %s380
        %s382 = sand.u32 %s76, 1
        %s383 = smul.addr %s382, 64
        %s384 = scalar_lea.vmem [#allocation2], %s383
        // Predicated region
        $region57: #{forward.4} parent=55 // pred_check
          %p385 = pneg %p89
        $region58: #{forward.4} parent=55 // pred_check_branch
          %387 = sbr.rel (%p385) target = $region60
        $region59: #{forward.4} parent=55 // pred_region
          %388 = dma.done %s381, 1024
        $region60: #{forward.4} parent=55 // pred_fallthru
          _
        %s389 = sand.u32 %s180, 1
        %s390 = scalar_lea.sflag [#allocation5], %s389
        %s391 = sand.u32 %s180, 1
        %s392 = smul.addr %s391, 128
        %s393 = scalar_lea.vmem [#allocation4], %s392
        // Predicated region
        $region61: #{forward.4} parent=55 // pred_check
          %p394 = pneg %p193
        $region62: #{forward.4} parent=55 // pred_check_branch
          %396 = sbr.rel (%p394) target = $region64
        $region63: #{forward.4} parent=55 // pred_region
          %397 = dma.done %s390, 2048
        $region64: #{forward.4} parent=55 // pred_fallthru
          _
        %p398 = pneg %p42
        %p399 = pneg %p39
        %p400 = pneg %p63
        %p401 = pneg %p60
        %s402 = sand.u32 %s76, 1
        %s403 = scalar_lea.sflag [#allocation3], %s402
        %s404 = sand.u32 %s76, 1
        %s405 = smul.addr %s404, 64
        %s406 = scalar_lea.vmem [#allocation2], %s405
        %p407 = pneg %p89
        %p408 = pneg %p86
        %p409 = scmp.lt.s32.totalorder %s26, 1
        %s410 = scalar_select %p409, %s26, 1
        %s411 = smul.addr %s410, 4
        %s412 = scalar_lea.vmem %s3, %s411
        %p413 = pneg %p115
        %p414 = pneg %p112
        %p415 = scmp.lt.s32.totalorder %s26, 1
        %s416 = scalar_select %p415, %s26, 1
        %s417 = smul.addr %s416, 4
        %s418 = scalar_lea.vmem %s4, %s417
        %p419 = pneg %p141
        %p420 = pneg %p138
        %p421 = scmp.lt.s32.totalorder %s26, 1
        %s422 = scalar_select %p421, %s26, 1
        %s423 = smul.addr %s422, 4
        %s424 = scalar_lea.vmem %s5, %s423
        %p425 = pneg %p167
        %p426 = pneg %p164
        %s427 = sand.u32 %s180, 1
        %s428 = scalar_lea.sflag [#allocation5], %s427
        %s429 = sand.u32 %s180, 1
        %s430 = smul.addr %s429, 128
        %s431 = scalar_lea.vmem [#allocation4], %s430
        %p432 = pneg %p193
        %p433 = pneg %p190
        %p434 = scmp.lt.s32.totalorder %s26, 1
        %s435 = scalar_select %p434, %s26, 1
        %s436 = smul.addr %s435, 16
        %s437 = smul.addr %s436, 4
        %s438 = scalar_lea.vmem %s7, %s437
        %p439 = pneg %p219
        %p440 = pneg %p216
        %p441 = scmp.lt.s32.totalorder %s26, 1
        %s442 = scalar_select %p441, %s26, 1
        %s443 = scalar_lea.vmem %s8, %s442
        %p444 = pneg %p245
        %p445 = pneg %p242
        %p446 = pneg %p271
        %p447 = pneg %p268
        %s448 = sand.u32 %s258, 1
        %s449 = sand.u32 %s258, 1
        %s450 = smul.addr %s449, 16
        %s451 = scalar_lea.vmem [#allocation6], %s450
        %p452 = scmp.lt.s32.totalorder %s26, 1
        %s453 = scalar_select %p452, %s26, 1
        %s454 = smul.addr %s453, 4
        %s455 = scalar_lea.vmem %s3, %s454
        %p456 = scmp.lt.s32.totalorder %s26, 1
        %s457 = scalar_select %p456, %s26, 1
        %s458 = smul.addr %s457, 4
        %s459 = scalar_lea.vmem %s4, %s458
        %p460 = scmp.lt.s32.totalorder %s26, 1
        %s461 = scalar_select %p460, %s26, 1
        %s462 = smul.addr %s461, 4
        %s463 = scalar_lea.vmem %s5, %s462
        %p464 = scmp.lt.s32.totalorder %s26, 1
        %s465 = scalar_select %p464, %s26, 1
        %s466 = smul.addr %s465, 16
        %s467 = smul.addr %s466, 4
        %s468 = scalar_lea.vmem %s7, %s467
        %p469 = scmp.lt.s32.totalorder %s26, 1
        %s470 = scalar_select %p469, %s26, 1
        %s471 = scalar_lea.vmem %s8, %s470
        %v473 = vlaneseq
        %v474 = vand.u32 %v473, 127
        %vm475 = vcmp.lt.s32.totalorder %v474, 12
        %v476 = vsel %vm475, 0.083333336, 0.0
        %v477 = vld [vmem:[%s459] sm:$0x7]
        %v478 = vld [vmem:[%s463] sm:$0x7]
        %v479 = vld [vmem:[%s0] sm:$0xff]
        %v480 = vld [vmem:[%s0 + $0x8] sm:$0xff]
        %v481 = vpack.c.bf16 %v480, %v479
        %v482 = vld [vmem:[%s384] sm:$0xf]
        %v483 = vld [vmem:[%s384 + $0x4] sm:$0xf]
        %v484 = vld [vmem:[%s384 + $0x8] sm:$0xf]
        %v485 = vld [vmem:[%s384 + $0xc] sm:$0xf]
        %v486 = vld [vmem:[%s384 + $0x10] sm:$0xf]
        %v487 = vld [vmem:[%s384 + $0x14] sm:$0xf]
        %v488 = vld [vmem:[%s384 + $0x18] sm:$0xf]
        %v489 = vld [vmem:[%s384 + $0x1c] sm:$0xf]
        %v490 = vld [vmem:[%s384 + $0x20] sm:$0xf]
        %v491 = vld [vmem:[%s384 + $0x24] sm:$0xf]
        %v492 = vld [vmem:[%s384 + $0x28] sm:$0xf]
        %v493 = vld [vmem:[%s384 + $0x2c] sm:$0xf]
        %v494 = vld [vmem:[%s384 + $0x30] sm:$0xf]
        %v495 = vld [vmem:[%s384 + $0x34] sm:$0xf]
        %v496 = vld [vmem:[%s384 + $0x38] sm:$0xf]
        %v497 = vld [vmem:[%s384 + $0x3c] sm:$0xf]
        %v498 = vld [vmem:[%s1] sm:$0xff]
        %v499 = vld [vmem:[%s1 + $0x8] sm:$0xff]
        %v500 = vpack.c.bf16 %v499, %v498
        %v501 = vld [vmem:[%s455] sm:$0xf]
        %vm502 = vcmask 64512
        %v504 = vsel %vm502, %v500, 0
        %vm506 = vcmask 1043456
        %v508 = vsel %vm506, %v501, 0
        %510 = vmatprep.subr.bf16.mxu0 0
        %511 = vmatpush1.bf16.msra.mxu0 0
        %512 = vmatprep.subr.bf16.mxu0 0
        %513 = vmatpush1.bf16.msra.mxu0 0
        %514 = vmatprep.subr.bf16.mxu0 0
        %515 = vmatpush1.bf16.msra.mxu0 0
        %516 = vmatprep.subr.bf16.mxu0 0
        %517 = vmatpush1.bf16.msra.mxu0 0
        %518 = vmatprep.subr.bf16.mxu0 0
        %519 = vmatpush1.bf16.msra.mxu0 0
        %520 = vmatprep.subr.bf16.mxu0 0
        %521 = vmatpush1.bf16.msra.mxu0 0
        %522 = vmatprep.subr.bf16.mxu0 0
        %523 = vmatpush1.bf16.msra.mxu0 0
        %524 = vmatprep.subr.bf16.mxu0 0
        %525 = vmatpush1.bf16.msra.mxu0 %v508
        %526 = vmatprep.subr.bf16.mxu0 0
        %527 = vmatpush2.bf16.msra.mxu0 0
        %528 = vmatprep.subr.bf16.mxu0 0
        %529 = vmatpush2.bf16.msra.mxu0 0
        %530 = vmatprep.subr.bf16.mxu0 0
        %531 = vmatpush2.bf16.msra.mxu0 0
        %532 = vmatprep.subr.bf16.mxu0 0
        %533 = vmatpush2.bf16.msra.mxu0 0
        %534 = vmatprep.subr.bf16.mxu0 0
        %535 = vmatpush2.bf16.msra.mxu0 0
        %536 = vmatprep.subr.bf16.mxu0 0
        %537 = vmatpush2.bf16.msra.mxu0 0
        %538 = vmatprep.subr.bf16.mxu0 0
        %539 = vmatpush2.bf16.msra.mxu0 0
        %540 = vmatprep.subr.bf16.mxu0 0
        %541 = vmatpush2.bf16.msra.mxu0 0
        %542 = vmatprep.mubr.bf16.mxu0 0
        %543 = vmatmul.mubr.bf16.gmra.mxu0 %v504
        %v544 = vpop.f32.mrf.mxu0
        %v545 = vadd.f32 0.0, %v544
        %v546 = vpop.f32.mrf.mxu0
        %v547 = vpop.f32.mrf.mxu0
        %v548 = vadd.f32 0.0, %v547
        %v549 = vpop.f32.mrf.mxu0
        %550 = vdwg.mxu0
        %v567 = vunpack.c.l.b16 %v482
        %v568 = vunpack.c.l.b16 %v483
        %v569 = vunpack.c.l.b16 %v484
        %v570 = vunpack.c.l.b16 %v485
        %v571 = vunpack.c.l.b16 %v486
        %v572 = vunpack.c.l.b16 %v487
        %v573 = vunpack.c.l.b16 %v488
        %v574 = vunpack.c.l.b16 %v489
        %v575 = vunpack.c.l.b16 %v490
        %v576 = vunpack.c.l.b16 %v491
        %v577 = vunpack.c.l.b16 %v492
        %v578 = vunpack.c.l.b16 %v493
        %v579 = vunpack.c.l.b16 %v494
        %v580 = vunpack.c.l.b16 %v495
        %v581 = vunpack.c.l.b16 %v496
        %v582 = vunpack.c.l.b16 %v497
        %v583 = vpack.c.b16 %v568, %v567
        %v584 = vpack.c.b16 %v570, %v569
        %v585 = vpack.c.b16 %v572, %v571
        %v586 = vpack.c.b16 %v574, %v573
        %v587 = vpack.c.b16 %v576, %v575
        %v588 = vpack.c.b16 %v578, %v577
        %v589 = vpack.c.b16 %v580, %v579
        %v590 = vpack.c.b16 %v582, %v581
        %599 = vmatprep.subr.bf16.mxu0 0
        %600 = vmatpush1.bf16.msra.mxu0 %v590
        %601 = vmatprep.subr.bf16.mxu0 0
        %602 = vmatpush1.bf16.msra.mxu0 %v589
        %603 = vmatprep.subr.bf16.mxu0 0
        %604 = vmatpush1.bf16.msra.mxu0 %v588
        %605 = vmatprep.subr.bf16.mxu0 0
        %606 = vmatpush1.bf16.msra.mxu0 %v587
        %607 = vmatprep.subr.bf16.mxu0 0
        %608 = vmatpush1.bf16.msra.mxu0 %v586
        %609 = vmatprep.subr.bf16.mxu0 0
        %610 = vmatpush1.bf16.msra.mxu0 %v585
        %611 = vmatprep.subr.bf16.mxu0 0
        %612 = vmatpush1.bf16.msra.mxu0 %v584
        %613 = vmatprep.subr.bf16.mxu0 0
        %614 = vmatpush1.bf16.msra.mxu0 %v583
        %615 = vmatprep.subr.bf16.mxu0 0
        %616 = vmatpush2.bf16.msra.mxu0 0
        %617 = vmatprep.subr.bf16.mxu0 0
        %618 = vmatpush2.bf16.msra.mxu0 0
        %619 = vmatprep.subr.bf16.mxu0 0
        %620 = vmatpush2.bf16.msra.mxu0 0
        %621 = vmatprep.subr.bf16.mxu0 0
        %622 = vmatpush2.bf16.msra.mxu0 0
        %623 = vmatprep.subr.bf16.mxu0 0
        %624 = vmatpush2.bf16.msra.mxu0 0
        %625 = vmatprep.subr.bf16.mxu0 0
        %626 = vmatpush2.bf16.msra.mxu0 0
        %627 = vmatprep.subr.bf16.mxu0 0
        %628 = vmatpush2.bf16.msra.mxu0 0
        %629 = vmatprep.subr.bf16.mxu0 0
        %630 = vmatpush2.bf16.msra.mxu0 0
        %631 = vmatprep.mubr.bf16.mxu0 0
        %632 = vmatmul.mubr.bf16.gmra.mxu0 %v481
        %v633 = vpop.f32.mrf.mxu0
        %v634 = vadd.f32 %v545, %v633
        %v635 = vpop.f32.mrf.mxu0
        %v636 = vpop.f32.mrf.mxu0
        %v637 = vadd.f32 %v548, %v636
        %v638 = vpop.f32.mrf.mxu0
        %639 = vdwg.mxu0
        %vm640 = vcmask 130048
        %v642 = vsel %vm640, %v476, 0
        %644 = vmatprep.subr.mxu0 0.0
        %645 = vmatpush1.msra.mxu0 0.0
        %646 = vmatprep.subr.mxu0 0.0
        %647 = vmatpush1.msra.mxu0 0.0
        %648 = vmatprep.subr.mxu0 0.0
        %649 = vmatpush1.msra.mxu0 0.0
        %650 = vmatprep.subr.mxu0 0.0
        %651 = vmatpush1.msra.mxu0 0.0
        %652 = vmatprep.subr.mxu0 0.0
        %653 = vmatpush1.msra.mxu0 0.0
        %654 = vmatprep.subr.mxu0 0.0
        %655 = vmatpush1.msra.mxu0 0.0
        %656 = vmatprep.subr.mxu0 0.0
        %657 = vmatpush1.msra.mxu0 0.0
        %658 = vmatprep.subr.mxu0 0.0
        %659 = vmatpush1.msra.mxu0 0.0
        %660 = vmatprep.subr.mxu0 0.0
        %661 = vmatpush1.msra.mxu0 0.0
        %662 = vmatprep.subr.mxu0 0.0
        %663 = vmatpush1.msra.mxu0 0.0
        %664 = vmatprep.subr.mxu0 0.0
        %665 = vmatpush1.msra.mxu0 0.0
        %666 = vmatprep.subr.mxu0 0.0
        %667 = vmatpush1.msra.mxu0 0.0
        %668 = vmatprep.subr.mxu0 0.0
        %669 = vmatpush1.msra.mxu0 0.0
        %670 = vmatprep.subr.mxu0 0.0
        %671 = vmatpush1.msra.mxu0 0.0
        %672 = vmatprep.subr.mxu0 0.0
        %673 = vmatpush1.msra.mxu0 %v637
        %674 = vmatprep.subr.mxu0 0.0
        %675 = vmatpush1.msra.mxu0 %v634
        %676 = vmatprep.subr.mxu0 0.0
        %677 = vmatpush2.msra.mxu0 0.0
        %678 = vmatprep.subr.mxu0 0.0
        %679 = vmatpush2.msra.mxu0 0.0
        %680 = vmatprep.subr.mxu0 0.0
        %681 = vmatpush2.msra.mxu0 0.0
        %682 = vmatprep.subr.mxu0 0.0
        %683 = vmatpush2.msra.mxu0 0.0
        %684 = vmatprep.subr.mxu0 0.0
        %685 = vmatpush2.msra.mxu0 0.0
        %686 = vmatprep.subr.mxu0 0.0
        %687 = vmatpush2.msra.mxu0 0.0
        %688 = vmatprep.subr.mxu0 0.0
        %689 = vmatpush2.msra.mxu0 0.0
        %690 = vmatprep.subr.mxu0 0.0
        %691 = vmatpush2.msra.mxu0 0.0
        %692 = vmatprep.subr.mxu0 0.0
        %693 = vmatpush2.msra.mxu0 0.0
        %694 = vmatprep.subr.mxu0 0.0
        %695 = vmatpush2.msra.mxu0 0.0
        %696 = vmatprep.subr.mxu0 0.0
        %697 = vmatpush2.msra.mxu0 0.0
        %698 = vmatprep.subr.mxu0 0.0
        %699 = vmatpush2.msra.mxu0 0.0
        %700 = vmatprep.subr.mxu0 0.0
        %701 = vmatpush2.msra.mxu0 0.0
        %702 = vmatprep.subr.mxu0 0.0
        %703 = vmatpush2.msra.mxu0 0.0
        %704 = vmatprep.subr.mxu0 0.0
        %705 = vmatpush2.msra.mxu0 0.0
        %706 = vmatprep.subr.mxu0 0.0
        %707 = vmatpush2.msra.mxu0 0.0
        %708 = vmatprep.mubr.f32.mxu0 0.0
        %709 = vmatmul.mubr.f32.gmra.mxu0 %v642
        %v710 = vpop.f32.mrf.mxu0
        %v711 = vadd.f32 0.0, %v710
        %v712 = vpop.f32.mrf.mxu0
        %713 = vdwg.mxu0
        %v714 = vmul.f32 %v634, %v634
        %v715 = vmul.f32 %v637, %v637
        %716 = vmatprep.subr.mxu0 0.0
        %717 = vmatpush1.msra.mxu0 0.0
        %718 = vmatprep.subr.mxu0 0.0
        %719 = vmatpush1.msra.mxu0 0.0
        %720 = vmatprep.subr.mxu0 0.0
        %721 = vmatpush1.msra.mxu0 0.0
        %722 = vmatprep.subr.mxu0 0.0
        %723 = vmatpush1.msra.mxu0 0.0
        %724 = vmatprep.subr.mxu0 0.0
        %725 = vmatpush1.msra.mxu0 0.0
        %726 = vmatprep.subr.mxu0 0.0
        %727 = vmatpush1.msra.mxu0 0.0
        %728 = vmatprep.subr.mxu0 0.0
        %729 = vmatpush1.msra.mxu0 0.0
        %730 = vmatprep.subr.mxu0 0.0
        %731 = vmatpush1.msra.mxu0 0.0
        %732 = vmatprep.subr.mxu0 0.0
        %733 = vmatpush1.msra.mxu0 0.0
        %734 = vmatprep.subr.mxu0 0.0
        %735 = vmatpush1.msra.mxu0 0.0
        %736 = vmatprep.subr.mxu0 0.0
        %737 = vmatpush1.msra.mxu0 0.0
        %738 = vmatprep.subr.mxu0 0.0
        %739 = vmatpush1.msra.mxu0 0.0
        %740 = vmatprep.subr.mxu0 0.0
        %741 = vmatpush1.msra.mxu0 0.0
        %742 = vmatprep.subr.mxu0 0.0
        %743 = vmatpush1.msra.mxu0 0.0
        %744 = vmatprep.subr.mxu0 0.0
        %745 = vmatpush1.msra.mxu0 %v715
        %746 = vmatprep.subr.mxu0 0.0
        %747 = vmatpush1.msra.mxu0 %v714
        %748 = vmatprep.subr.mxu0 0.0
        %749 = vmatpush2.msra.mxu0 0.0
        %750 = vmatprep.subr.mxu0 0.0
        %751 = vmatpush2.msra.mxu0 0.0
        %752 = vmatprep.subr.mxu0 0.0
        %753 = vmatpush2.msra.mxu0 0.0
        %754 = vmatprep.subr.mxu0 0.0
        %755 = vmatpush2.msra.mxu0 0.0
        %756 = vmatprep.subr.mxu0 0.0
        %757 = vmatpush2.msra.mxu0 0.0
        %758 = vmatprep.subr.mxu0 0.0
        %759 = vmatpush2.msra.mxu0 0.0
        %760 = vmatprep.subr.mxu0 0.0
        %761 = vmatpush2.msra.mxu0 0.0
        %762 = vmatprep.subr.mxu0 0.0
        %763 = vmatpush2.msra.mxu0 0.0
        %764 = vmatprep.subr.mxu0 0.0
        %765 = vmatpush2.msra.mxu0 0.0
        %766 = vmatprep.subr.mxu0 0.0
        %767 = vmatpush2.msra.mxu0 0.0
        %768 = vmatprep.subr.mxu0 0.0
        %769 = vmatpush2.msra.mxu0 0.0
        %770 = vmatprep.subr.mxu0 0.0
        %771 = vmatpush2.msra.mxu0 0.0
        %772 = vmatprep.subr.mxu0 0.0
        %773 = vmatpush2.msra.mxu0 0.0
        %774 = vmatprep.subr.mxu0 0.0
        %775 = vmatpush2.msra.mxu0 0.0
        %776 = vmatprep.subr.mxu0 0.0
        %777 = vmatpush2.msra.mxu0 0.0
        %778 = vmatprep.subr.mxu0 0.0
        %779 = vmatpush2.msra.mxu0 0.0
        %780 = vmatprep.mubr.f32.mxu0 0.0
        %781 = vmatmul.mubr.f32.gmra.mxu0 %v642
        %v782 = vpop.f32.mrf.mxu0
        %v783 = vadd.f32 0.0, %v782
        %v784 = vpop.f32.mrf.mxu0
        %785 = vdwg.mxu0
        %v786 = vmul.f32 %v711, %v711
        %v787 = vsub.f32 %v783, %v786
        %v788 = vmax.f32 %v787, 0.0
        %v789 = vadd.f32 %v788, 1e-05
        %v790 = vrsqrt.pop %v789
        %v791 = vmul.f32 %v477, %v790
        %v792 = vmul.f32 %v711, %v791
        %v793 = vsub.f32 %v478, %v792
        %v794 = vlaneseq
        %v795 = vshrl.u32 %v794, 7
        %v796 = vsub.s32 0, %v795
        %v797 = vrot.slane %v791, %v796
        %v798 = vmul.f32 %v634, %v797
        %v799 = vmul.f32 %v637, %v797
        %v800 = vlaneseq
        %v801 = vshrl.u32 %v800, 7
        %v802 = vsub.s32 0, %v801
        %v803 = vrot.slane %v793, %v802
        %v804 = vadd.f32 %v798, %v803
        %v805 = vadd.f32 %v799, %v803
        %v806 = vmax.f32 %v804, 0.0
        %v807 = vmax.f32 %v805, 0.0
        %v808 = vpack.c.bf16 %v807, %v806
        %v809 = vld [vmem:[%s393] sm:$0xf]
        %v810 = vld [vmem:[%s393 + $0x4] sm:$0xf]
        %v811 = vld [vmem:[%s393 + $0x8] sm:$0xf]
        %v812 = vld [vmem:[%s393 + $0xc] sm:$0xf]
        %v813 = vld [vmem:[%s393 + $0x10] sm:$0xf]
        %v814 = vld [vmem:[%s393 + $0x14] sm:$0xf]
        %v815 = vld [vmem:[%s393 + $0x18] sm:$0xf]
        %v816 = vld [vmem:[%s393 + $0x1c] sm:$0xf]
        %v817 = vld [vmem:[%s393 + $0x20] sm:$0xf]
        %v818 = vld [vmem:[%s393 + $0x24] sm:$0xf]
        %v819 = vld [vmem:[%s393 + $0x28] sm:$0xf]
        %v820 = vld [vmem:[%s393 + $0x2c] sm:$0xf]
        %v821 = vld [vmem:[%s393 + $0x30] sm:$0xf]
        %v822 = vld [vmem:[%s393 + $0x34] sm:$0xf]
        %v823 = vld [vmem:[%s393 + $0x38] sm:$0xf]
        %v824 = vld [vmem:[%s393 + $0x3c] sm:$0xf]
        %v841 = vunpack.c.l.b16 %v809
        %v842 = vunpack.c.l.b16 %v810
        %v843 = vunpack.c.l.b16 %v811
        %v844 = vunpack.c.l.b16 %v812
        %v845 = vunpack.c.l.b16 %v813
        %v846 = vunpack.c.l.b16 %v814
        %v847 = vunpack.c.l.b16 %v815
        %v848 = vunpack.c.l.b16 %v816
        %v849 = vunpack.c.l.b16 %v817
        %v850 = vunpack.c.l.b16 %v818
        %v851 = vunpack.c.l.b16 %v819
        %v852 = vunpack.c.l.b16 %v820
        %v853 = vunpack.c.l.b16 %v821
        %v854 = vunpack.c.l.b16 %v822
        %v855 = vunpack.c.l.b16 %v823
        %v856 = vunpack.c.l.b16 %v824
        %v857 = vpack.c.b16 %v842, %v841
        %v858 = vpack.c.b16 %v844, %v843
        %v859 = vpack.c.b16 %v846, %v845
        %v860 = vpack.c.b16 %v848, %v847
        %v861 = vpack.c.b16 %v850, %v849
        %v862 = vpack.c.b16 %v852, %v851
        %v863 = vpack.c.b16 %v854, %v853
        %v864 = vpack.c.b16 %v856, %v855
        %873 = vmatprep.subr.bf16.mxu0 0
        %874 = vmatpush1.bf16.msra.mxu0 %v864
        %875 = vmatprep.subr.bf16.mxu0 0
        %876 = vmatpush1.bf16.msra.mxu0 %v863
        %877 = vmatprep.subr.bf16.mxu0 0
        %878 = vmatpush1.bf16.msra.mxu0 %v862
        %879 = vmatprep.subr.bf16.mxu0 0
        %880 = vmatpush1.bf16.msra.mxu0 %v861
        %881 = vmatprep.subr.bf16.mxu0 0
        %882 = vmatpush1.bf16.msra.mxu0 %v860
        %883 = vmatprep.subr.bf16.mxu0 0
        %884 = vmatpush1.bf16.msra.mxu0 %v859
        %885 = vmatprep.subr.bf16.mxu0 0
        %886 = vmatpush1.bf16.msra.mxu0 %v858
        %887 = vmatprep.subr.bf16.mxu0 0
        %888 = vmatpush1.bf16.msra.mxu0 %v857
        %889 = vmatprep.subr.bf16.mxu0 0
        %890 = vmatpush2.bf16.msra.mxu0 0
        %891 = vmatprep.subr.bf16.mxu0 0
        %892 = vmatpush2.bf16.msra.mxu0 0
        %893 = vmatprep.subr.bf16.mxu0 0
        %894 = vmatpush2.bf16.msra.mxu0 0
        %895 = vmatprep.subr.bf16.mxu0 0
        %896 = vmatpush2.bf16.msra.mxu0 0
        %897 = vmatprep.subr.bf16.mxu0 0
        %898 = vmatpush2.bf16.msra.mxu0 0
        %899 = vmatprep.subr.bf16.mxu0 0
        %900 = vmatpush2.bf16.msra.mxu0 0
        %901 = vmatprep.subr.bf16.mxu0 0
        %902 = vmatpush2.bf16.msra.mxu0 0
        %903 = vmatprep.subr.bf16.mxu0 0
        %904 = vmatpush2.bf16.msra.mxu0 0
        %905 = vmatprep.mubr.bf16.mxu0 0
        %906 = vmatmul.mubr.bf16.gmra.mxu0 %v808
        %v907 = vpop.f32.mrf.mxu0
        %v908 = vadd.f32 0.0, %v907
        %v909 = vpop.f32.mrf.mxu0
        %v910 = vpop.f32.mrf.mxu0
        %v911 = vadd.f32 0.0, %v910
        %v912 = vpop.f32.mrf.mxu0
        %913 = vdwg.mxu0
        %914 = vmatprep.subr.mxu0 0.0
        %915 = vmatpush1.msra.mxu0 0.0
        %916 = vmatprep.subr.mxu0 0.0
        %917 = vmatpush1.msra.mxu0 0.0
        %918 = vmatprep.subr.mxu0 0.0
        %919 = vmatpush1.msra.mxu0 0.0
        %920 = vmatprep.subr.mxu0 0.0
        %921 = vmatpush1.msra.mxu0 0.0
        %922 = vmatprep.subr.mxu0 0.0
        %923 = vmatpush1.msra.mxu0 0.0
        %924 = vmatprep.subr.mxu0 0.0
        %925 = vmatpush1.msra.mxu0 0.0
        %926 = vmatprep.subr.mxu0 0.0
        %927 = vmatpush1.msra.mxu0 0.0
        %928 = vmatprep.subr.mxu0 0.0
        %929 = vmatpush1.msra.mxu0 0.0
        %930 = vmatprep.subr.mxu0 0.0
        %931 = vmatpush1.msra.mxu0 0.0
        %932 = vmatprep.subr.mxu0 0.0
        %933 = vmatpush1.msra.mxu0 0.0
        %934 = vmatprep.subr.mxu0 0.0
        %935 = vmatpush1.msra.mxu0 0.0
        %936 = vmatprep.subr.mxu0 0.0
        %937 = vmatpush1.msra.mxu0 0.0
        %938 = vmatprep.subr.mxu0 0.0
        %939 = vmatpush1.msra.mxu0 0.0
        %940 = vmatprep.subr.mxu0 0.0
        %941 = vmatpush1.msra.mxu0 0.0
        %942 = vmatprep.subr.mxu0 0.0
        %943 = vmatpush1.msra.mxu0 %v911
        %944 = vmatprep.subr.mxu0 0.0
        %945 = vmatpush1.msra.mxu0 %v908
        %946 = vmatprep.subr.mxu0 0.0
        %947 = vmatpush2.msra.mxu0 0.0
        %948 = vmatprep.subr.mxu0 0.0
        %949 = vmatpush2.msra.mxu0 0.0
        %950 = vmatprep.subr.mxu0 0.0
        %951 = vmatpush2.msra.mxu0 0.0
        %952 = vmatprep.subr.mxu0 0.0
        %953 = vmatpush2.msra.mxu0 0.0
        %954 = vmatprep.subr.mxu0 0.0
        %955 = vmatpush2.msra.mxu0 0.0
        %956 = vmatprep.subr.mxu0 0.0
        %957 = vmatpush2.msra.mxu0 0.0
        %958 = vmatprep.subr.mxu0 0.0
        %959 = vmatpush2.msra.mxu0 0.0
        %960 = vmatprep.subr.mxu0 0.0
        %961 = vmatpush2.msra.mxu0 0.0
        %962 = vmatprep.subr.mxu0 0.0
        %963 = vmatpush2.msra.mxu0 0.0
        %964 = vmatprep.subr.mxu0 0.0
        %965 = vmatpush2.msra.mxu0 0.0
        %966 = vmatprep.subr.mxu0 0.0
        %967 = vmatpush2.msra.mxu0 0.0
        %968 = vmatprep.subr.mxu0 0.0
        %969 = vmatpush2.msra.mxu0 0.0
        %970 = vmatprep.subr.mxu0 0.0
        %971 = vmatpush2.msra.mxu0 0.0
        %972 = vmatprep.subr.mxu0 0.0
        %973 = vmatpush2.msra.mxu0 0.0
        %974 = vmatprep.subr.mxu0 0.0
        %975 = vmatpush2.msra.mxu0 0.0
        %976 = vmatprep.subr.mxu0 0.0
        %977 = vmatpush2.msra.mxu0 0.0
        %978 = vmatprep.mubr.f32.mxu0 0.0
        %979 = vmatmul.mubr.f32.gmra.mxu0 %v642
        %v980 = vpop.f32.mrf.mxu0
        %v981 = vadd.f32 0.0, %v980
        %v982 = vpop.f32.mrf.mxu0
        %983 = vdwg.mxu0
        %v984 = vmul.f32 %v908, %v908
        %v985 = vmul.f32 %v911, %v911
        %986 = vmatprep.subr.mxu0 0.0
        %987 = vmatpush1.msra.mxu0 0.0
        %988 = vmatprep.subr.mxu0 0.0
        %989 = vmatpush1.msra.mxu0 0.0
        %990 = vmatprep.subr.mxu0 0.0
        %991 = vmatpush1.msra.mxu0 0.0
        %992 = vmatprep.subr.mxu0 0.0
        %993 = vmatpush1.msra.mxu0 0.0
        %994 = vmatprep.subr.mxu0 0.0
        %995 = vmatpush1.msra.mxu0 0.0
        %996 = vmatprep.subr.mxu0 0.0
        %997 = vmatpush1.msra.mxu0 0.0
        %998 = vmatprep.subr.mxu0 0.0
        %999 = vmatpush1.msra.mxu0 0.0
        %1000 = vmatprep.subr.mxu0 0.0
        %1001 = vmatpush1.msra.mxu0 0.0
        %1002 = vmatprep.subr.mxu0 0.0
        %1003 = vmatpush1.msra.mxu0 0.0
        %1004 = vmatprep.subr.mxu0 0.0
        %1005 = vmatpush1.msra.mxu0 0.0
        %1006 = vmatprep.subr.mxu0 0.0
        %1007 = vmatpush1.msra.mxu0 0.0
        %1008 = vmatprep.subr.mxu0 0.0
        %1009 = vmatpush1.msra.mxu0 0.0
        %1010 = vmatprep.subr.mxu0 0.0
        %1011 = vmatpush1.msra.mxu0 0.0
        %1012 = vmatprep.subr.mxu0 0.0
        %1013 = vmatpush1.msra.mxu0 0.0
        %1014 = vmatprep.subr.mxu0 0.0
        %1015 = vmatpush1.msra.mxu0 %v985
        %1016 = vmatprep.subr.mxu0 0.0
        %1017 = vmatpush1.msra.mxu0 %v984
        %1018 = vmatprep.subr.mxu0 0.0
        %1019 = vmatpush2.msra.mxu0 0.0
        %1020 = vmatprep.subr.mxu0 0.0
        %1021 = vmatpush2.msra.mxu0 0.0
        %1022 = vmatprep.subr.mxu0 0.0
        %1023 = vmatpush2.msra.mxu0 0.0
        %1024 = vmatprep.subr.mxu0 0.0
        %1025 = vmatpush2.msra.mxu0 0.0
        %1026 = vmatprep.subr.mxu0 0.0
        %1027 = vmatpush2.msra.mxu0 0.0
        %1028 = vmatprep.subr.mxu0 0.0
        %1029 = vmatpush2.msra.mxu0 0.0
        %1030 = vmatprep.subr.mxu0 0.0
        %1031 = vmatpush2.msra.mxu0 0.0
        %1032 = vmatprep.subr.mxu0 0.0
        %1033 = vmatpush2.msra.mxu0 0.0
        %1034 = vmatprep.subr.mxu0 0.0
        %1035 = vmatpush2.msra.mxu0 0.0
        %1036 = vmatprep.subr.mxu0 0.0
        %1037 = vmatpush2.msra.mxu0 0.0
        %1038 = vmatprep.subr.mxu0 0.0
        %1039 = vmatpush2.msra.mxu0 0.0
        %1040 = vmatprep.subr.mxu0 0.0
        %1041 = vmatpush2.msra.mxu0 0.0
        %1042 = vmatprep.subr.mxu0 0.0
        %1043 = vmatpush2.msra.mxu0 0.0
        %1044 = vmatprep.subr.mxu0 0.0
        %1045 = vmatpush2.msra.mxu0 0.0
        %1046 = vmatprep.subr.mxu0 0.0
        %1047 = vmatpush2.msra.mxu0 0.0
        %1048 = vmatprep.subr.mxu0 0.0
        %1049 = vmatpush2.msra.mxu0 0.0
        %1050 = vmatprep.mubr.f32.mxu0 0.0
        %1051 = vmatmul.mubr.f32.gmra.mxu0 %v642
        %v1052 = vpop.f32.mrf.mxu0
        %v1053 = vadd.f32 0.0, %v1052
        %v1054 = vpop.f32.mrf.mxu0
        %1055 = vdwg.mxu0
        %v1056 = vmul.f32 %v981, %v981
        %v1057 = vsub.f32 %v1053, %v1056
        %v1058 = vmax.f32 %v1057, 0.0
        %v1059 = vadd.f32 %v1058, 1e-05
        %v1060 = vrsqrt.pop %v1059
        %v1062 = vrot.slane %v1060, 7
        %v1064 = vmul.f32 %v477, %v1062
        %v1066 = vrot.slane %v1064, 1
        %v1068 = vmul.f32 %v981, %v1066
        %v1070 = vrot.slane %v1068, 7
        %v1072 = vsub.f32 %v478, %v1070
        %v1073 = vlaneseq
        %v1074 = vshrl.u32 %v1073, 7
        %v1075 = vsub.s32 1, %v1074
        %v1076 = vrot.slane %v1064, %v1075
        %v1077 = vmul.f32 %v908, %v1076
        %v1078 = vmul.f32 %v911, %v1076
        %v1079 = vlaneseq
        %v1080 = vshrl.u32 %v1079, 7
        %v1081 = vsub.s32 1, %v1080
        %v1082 = vrot.slane %v1072, %v1081
        %v1083 = vadd.f32 %v1077, %v1082
        %v1084 = vadd.f32 %v1078, %v1082
        %v1085 = vmax.f32 %v1083, 0.0
        %v1086 = vmax.f32 %v1084, 0.0
        %v1087 = vpack.c.bf16 %v1086, %v1085
        %s1088 = scalar_lea.vmem %s393, 64 [#allocation4]
        %v1089 = vld [vmem:[%s1088] sm:$0xf]
        %v1090 = vld [vmem:[%s1088 + $0x4] sm:$0xf]
        %v1091 = vld [vmem:[%s1088 + $0x8] sm:$0xf]
        %v1092 = vld [vmem:[%s1088 + $0xc] sm:$0xf]
        %v1093 = vld [vmem:[%s1088 + $0x10] sm:$0xf]
        %v1094 = vld [vmem:[%s1088 + $0x14] sm:$0xf]
        %v1095 = vld [vmem:[%s1088 + $0x18] sm:$0xf]
        %v1096 = vld [vmem:[%s1088 + $0x1c] sm:$0xf]
        %v1097 = vld [vmem:[%s1088 + $0x20] sm:$0xf]
        %v1098 = vld [vmem:[%s1088 + $0x24] sm:$0xf]
        %v1099 = vld [vmem:[%s1088 + $0x28] sm:$0xf]
        %v1100 = vld [vmem:[%s1088 + $0x2c] sm:$0xf]
        %v1101 = vld [vmem:[%s1088 + $0x30] sm:$0xf]
        %v1102 = vld [vmem:[%s1088 + $0x34] sm:$0xf]
        %v1103 = vld [vmem:[%s1088 + $0x38] sm:$0xf]
        %v1104 = vld [vmem:[%s1088 + $0x3c] sm:$0xf]
        %v1121 = vunpack.c.l.b16 %v1089
        %v1122 = vunpack.c.l.b16 %v1090
        %v1123 = vunpack.c.l.b16 %v1091
        %v1124 = vunpack.c.l.b16 %v1092
        %v1125 = vunpack.c.l.b16 %v1093
        %v1126 = vunpack.c.l.b16 %v1094
        %v1127 = vunpack.c.l.b16 %v1095
        %v1128 = vunpack.c.l.b16 %v1096
        %v1129 = vunpack.c.l.b16 %v1097
        %v1130 = vunpack.c.l.b16 %v1098
        %v1131 = vunpack.c.l.b16 %v1099
        %v1132 = vunpack.c.l.b16 %v1100
        %v1133 = vunpack.c.l.b16 %v1101
        %v1134 = vunpack.c.l.b16 %v1102
        %v1135 = vunpack.c.l.b16 %v1103
        %v1136 = vunpack.c.l.b16 %v1104
        %v1137 = vpack.c.b16 %v1122, %v1121
        %v1138 = vpack.c.b16 %v1124, %v1123
        %v1139 = vpack.c.b16 %v1126, %v1125
        %v1140 = vpack.c.b16 %v1128, %v1127
        %v1141 = vpack.c.b16 %v1130, %v1129
        %v1142 = vpack.c.b16 %v1132, %v1131
        %v1143 = vpack.c.b16 %v1134, %v1133
        %v1144 = vpack.c.b16 %v1136, %v1135
        %1153 = vmatprep.subr.bf16.mxu0 0
        %1154 = vmatpush1.bf16.msra.mxu0 %v1144
        %1155 = vmatprep.subr.bf16.mxu0 0
        %1156 = vmatpush1.bf16.msra.mxu0 %v1143
        %1157 = vmatprep.subr.bf16.mxu0 0
        %1158 = vmatpush1.bf16.msra.mxu0 %v1142
        %1159 = vmatprep.subr.bf16.mxu0 0
        %1160 = vmatpush1.bf16.msra.mxu0 %v1141
        %1161 = vmatprep.subr.bf16.mxu0 0
        %1162 = vmatpush1.bf16.msra.mxu0 %v1140
        %1163 = vmatprep.subr.bf16.mxu0 0
        %1164 = vmatpush1.bf16.msra.mxu0 %v1139
        %1165 = vmatprep.subr.bf16.mxu0 0
        %1166 = vmatpush1.bf16.msra.mxu0 %v1138
        %1167 = vmatprep.subr.bf16.mxu0 0
        %1168 = vmatpush1.bf16.msra.mxu0 %v1137
        %1169 = vmatprep.subr.bf16.mxu0 0
        %1170 = vmatpush2.bf16.msra.mxu0 0
        %1171 = vmatprep.subr.bf16.mxu0 0
        %1172 = vmatpush2.bf16.msra.mxu0 0
        %1173 = vmatprep.subr.bf16.mxu0 0
        %1174 = vmatpush2.bf16.msra.mxu0 0
        %1175 = vmatprep.subr.bf16.mxu0 0
        %1176 = vmatpush2.bf16.msra.mxu0 0
        %1177 = vmatprep.subr.bf16.mxu0 0
        %1178 = vmatpush2.bf16.msra.mxu0 0
        %1179 = vmatprep.subr.bf16.mxu0 0
        %1180 = vmatpush2.bf16.msra.mxu0 0
        %1181 = vmatprep.subr.bf16.mxu0 0
        %1182 = vmatpush2.bf16.msra.mxu0 0
        %1183 = vmatprep.subr.bf16.mxu0 0
        %1184 = vmatpush2.bf16.msra.mxu0 0
        %1185 = vmatprep.mubr.bf16.mxu0 0
        %1186 = vmatmul.mubr.bf16.gmra.mxu0 %v1087
        %v1187 = vpop.f32.mrf.mxu0
        %v1188 = vadd.f32 0.0, %v1187
        %v1189 = vpop.f32.mrf.mxu0
        %v1190 = vpop.f32.mrf.mxu0
        %v1191 = vadd.f32 0.0, %v1190
        %v1192 = vpop.f32.mrf.mxu0
        %1193 = vdwg.mxu0
        %1194 = vmatprep.subr.mxu0 0.0
        %1195 = vmatpush1.msra.mxu0 0.0
        %1196 = vmatprep.subr.mxu0 0.0
        %1197 = vmatpush1.msra.mxu0 0.0
        %1198 = vmatprep.subr.mxu0 0.0
        %1199 = vmatpush1.msra.mxu0 0.0
        %1200 = vmatprep.subr.mxu0 0.0
        %1201 = vmatpush1.msra.mxu0 0.0
        %1202 = vmatprep.subr.mxu0 0.0
        %1203 = vmatpush1.msra.mxu0 0.0
        %1204 = vmatprep.subr.mxu0 0.0
        %1205 = vmatpush1.msra.mxu0 0.0
        %1206 = vmatprep.subr.mxu0 0.0
        %1207 = vmatpush1.msra.mxu0 0.0
        %1208 = vmatprep.subr.mxu0 0.0
        %1209 = vmatpush1.msra.mxu0 0.0
        %1210 = vmatprep.subr.mxu0 0.0
        %1211 = vmatpush1.msra.mxu0 0.0
        %1212 = vmatprep.subr.mxu0 0.0
        %1213 = vmatpush1.msra.mxu0 0.0
        %1214 = vmatprep.subr.mxu0 0.0
        %1215 = vmatpush1.msra.mxu0 0.0
        %1216 = vmatprep.subr.mxu0 0.0
        %1217 = vmatpush1.msra.mxu0 0.0
        %1218 = vmatprep.subr.mxu0 0.0
        %1219 = vmatpush1.msra.mxu0 0.0
        %1220 = vmatprep.subr.mxu0 0.0
        %1221 = vmatpush1.msra.mxu0 0.0
        %1222 = vmatprep.subr.mxu0 0.0
        %1223 = vmatpush1.msra.mxu0 %v1191
        %1224 = vmatprep.subr.mxu0 0.0
        %1225 = vmatpush1.msra.mxu0 %v1188
        %1226 = vmatprep.subr.mxu0 0.0
        %1227 = vmatpush2.msra.mxu0 0.0
        %1228 = vmatprep.subr.mxu0 0.0
        %1229 = vmatpush2.msra.mxu0 0.0
        %1230 = vmatprep.subr.mxu0 0.0
        %1231 = vmatpush2.msra.mxu0 0.0
        %1232 = vmatprep.subr.mxu0 0.0
        %1233 = vmatpush2.msra.mxu0 0.0
        %1234 = vmatprep.subr.mxu0 0.0
        %1235 = vmatpush2.msra.mxu0 0.0
        %1236 = vmatprep.subr.mxu0 0.0
        %1237 = vmatpush2.msra.mxu0 0.0
        %1238 = vmatprep.subr.mxu0 0.0
        %1239 = vmatpush2.msra.mxu0 0.0
        %1240 = vmatprep.subr.mxu0 0.0
        %1241 = vmatpush2.msra.mxu0 0.0
        %1242 = vmatprep.subr.mxu0 0.0
        %1243 = vmatpush2.msra.mxu0 0.0
        %1244 = vmatprep.subr.mxu0 0.0
        %1245 = vmatpush2.msra.mxu0 0.0
        %1246 = vmatprep.subr.mxu0 0.0
        %1247 = vmatpush2.msra.mxu0 0.0
        %1248 = vmatprep.subr.mxu0 0.0
        %1249 = vmatpush2.msra.mxu0 0.0
        %1250 = vmatprep.subr.mxu0 0.0
        %1251 = vmatpush2.msra.mxu0 0.0
        %1252 = vmatprep.subr.mxu0 0.0
        %1253 = vmatpush2.msra.mxu0 0.0
        %1254 = vmatprep.subr.mxu0 0.0
        %1255 = vmatpush2.msra.mxu0 0.0
        %1256 = vmatprep.subr.mxu0 0.0
        %1257 = vmatpush2.msra.mxu0 0.0
        %1258 = vmatprep.mubr.f32.mxu0 0.0
        %1259 = vmatmul.mubr.f32.gmra.mxu0 %v642
        %v1260 = vpop.f32.mrf.mxu0
        %v1261 = vadd.f32 0.0, %v1260
        %v1262 = vpop.f32.mrf.mxu0
        %1263 = vdwg.mxu0
        %v1264 = vmul.f32 %v1188, %v1188
        %v1265 = vmul.f32 %v1191, %v1191
        %1266 = vmatprep.subr.mxu0 0.0
        %1267 = vmatpush1.msra.mxu0 0.0
        %1268 = vmatprep.subr.mxu0 0.0
        %1269 = vmatpush1.msra.mxu0 0.0
        %1270 = vmatprep.subr.mxu0 0.0
        %1271 = vmatpush1.msra.mxu0 0.0
        %1272 = vmatprep.subr.mxu0 0.0
        %1273 = vmatpush1.msra.mxu0 0.0
        %1274 = vmatprep.subr.mxu0 0.0
        %1275 = vmatpush1.msra.mxu0 0.0
        %1276 = vmatprep.subr.mxu0 0.0
        %1277 = vmatpush1.msra.mxu0 0.0
        %1278 = vmatprep.subr.mxu0 0.0
        %1279 = vmatpush1.msra.mxu0 0.0
        %1280 = vmatprep.subr.mxu0 0.0
        %1281 = vmatpush1.msra.mxu0 0.0
        %1282 = vmatprep.subr.mxu0 0.0
        %1283 = vmatpush1.msra.mxu0 0.0
        %1284 = vmatprep.subr.mxu0 0.0
        %1285 = vmatpush1.msra.mxu0 0.0
        %1286 = vmatprep.subr.mxu0 0.0
        %1287 = vmatpush1.msra.mxu0 0.0
        %1288 = vmatprep.subr.mxu0 0.0
        %1289 = vmatpush1.msra.mxu0 0.0
        %1290 = vmatprep.subr.mxu0 0.0
        %1291 = vmatpush1.msra.mxu0 0.0
        %1292 = vmatprep.subr.mxu0 0.0
        %1293 = vmatpush1.msra.mxu0 0.0
        %1294 = vmatprep.subr.mxu0 0.0
        %1295 = vmatpush1.msra.mxu0 %v1265
        %1296 = vmatprep.subr.mxu0 0.0
        %1297 = vmatpush1.msra.mxu0 %v1264
        %1298 = vmatprep.subr.mxu0 0.0
        %1299 = vmatpush2.msra.mxu0 0.0
        %1300 = vmatprep.subr.mxu0 0.0
        %1301 = vmatpush2.msra.mxu0 0.0
        %1302 = vmatprep.subr.mxu0 0.0
        %1303 = vmatpush2.msra.mxu0 0.0
        %1304 = vmatprep.subr.mxu0 0.0
        %1305 = vmatpush2.msra.mxu0 0.0
        %1306 = vmatprep.subr.mxu0 0.0
        %1307 = vmatpush2.msra.mxu0 0.0
        %1308 = vmatprep.subr.mxu0 0.0
        %1309 = vmatpush2.msra.mxu0 0.0
        %1310 = vmatprep.subr.mxu0 0.0
        %1311 = vmatpush2.msra.mxu0 0.0
        %1312 = vmatprep.subr.mxu0 0.0
        %1313 = vmatpush2.msra.mxu0 0.0
        %1314 = vmatprep.subr.mxu0 0.0
        %1315 = vmatpush2.msra.mxu0 0.0
        %1316 = vmatprep.subr.mxu0 0.0
        %1317 = vmatpush2.msra.mxu0 0.0
        %1318 = vmatprep.subr.mxu0 0.0
        %1319 = vmatpush2.msra.mxu0 0.0
        %1320 = vmatprep.subr.mxu0 0.0
        %1321 = vmatpush2.msra.mxu0 0.0
        %1322 = vmatprep.subr.mxu0 0.0
        %1323 = vmatpush2.msra.mxu0 0.0
        %1324 = vmatprep.subr.mxu0 0.0
        %1325 = vmatpush2.msra.mxu0 0.0
        %1326 = vmatprep.subr.mxu0 0.0
        %1327 = vmatpush2.msra.mxu0 0.0
        %1328 = vmatprep.subr.mxu0 0.0
        %1329 = vmatpush2.msra.mxu0 0.0
        %1330 = vmatprep.mubr.f32.mxu0 0.0
        %1331 = vmatmul.mubr.f32.gmra.mxu0 %v642
        %v1332 = vpop.f32.mrf.mxu0
        %v1333 = vadd.f32 0.0, %v1332
        %v1334 = vpop.f32.mrf.mxu0
        %1335 = vdwg.mxu0
        %v1336 = vmul.f32 %v1261, %v1261
        %v1337 = vsub.f32 %v1333, %v1336
        %v1338 = vmax.f32 %v1337, 0.0
        %v1339 = vadd.f32 %v1338, 1e-05
        %v1340 = vrsqrt.pop %v1339
        %v1342 = vrot.slane %v1340, 6
        %v1344 = vmul.f32 %v477, %v1342
        %v1346 = vrot.slane %v1344, 2
        %v1348 = vmul.f32 %v1261, %v1346
        %v1350 = vrot.slane %v1348, 6
        %v1352 = vsub.f32 %v478, %v1350
        %v1353 = vlaneseq
        %v1354 = vshrl.u32 %v1353, 7
        %v1355 = vsub.s32 2, %v1354
        %v1356 = vrot.slane %v1344, %v1355
        %v1357 = vmul.f32 %v1188, %v1356
        %v1358 = vmul.f32 %v1191, %v1356
        %v1359 = vlaneseq
        %v1360 = vshrl.u32 %v1359, 7
        %v1361 = vsub.s32 2, %v1360
        %v1362 = vrot.slane %v1352, %v1361
        %v1363 = vadd.f32 %v1357, %v1362
        %v1364 = vadd.f32 %v1358, %v1362
        %v1365 = vmax.f32 %v1363, 0.0
        %v1366 = vmax.f32 %v1364, 0.0
        %v1367 = vpack.c.bf16 %v1366, %v1365
        %v1368 = vld [vmem:[%s468] sm:$0xf]
        %v1369 = vld [vmem:[%s468 + $0x4] sm:$0xf]
        %v1370 = vld [vmem:[%s468 + $0x8] sm:$0xf]
        %v1371 = vld [vmem:[%s468 + $0xc] sm:$0xf]
        %v1372 = vld [vmem:[%s468 + $0x10] sm:$0xf]
        %v1373 = vld [vmem:[%s468 + $0x14] sm:$0xf]
        %v1374 = vld [vmem:[%s468 + $0x18] sm:$0xf]
        %v1375 = vld [vmem:[%s468 + $0x1c] sm:$0xf]
        %v1376 = vld [vmem:[%s468 + $0x20] sm:$0xf]
        %v1377 = vld [vmem:[%s468 + $0x24] sm:$0xf]
        %v1378 = vld [vmem:[%s468 + $0x28] sm:$0xf]
        %v1379 = vld [vmem:[%s468 + $0x2c] sm:$0xf]
        %v1380 = vld [vmem:[%s468 + $0x30] sm:$0xf]
        %v1381 = vld [vmem:[%s468 + $0x34] sm:$0xf]
        %v1382 = vld [vmem:[%s468 + $0x38] sm:$0xf]
        %v1383 = vld [vmem:[%s468 + $0x3c] sm:$0xf]
        %v1384 = vld [vmem:[%s471] sm:$0x1]
        %v1386 = vlaneseq
        %v1387 = vshrl.u32 %v1386, 7
        %v1388 = vsub.s32 0, %v1387
        %v1389 = vrot.slane %v1384, %v1388
        %v1407 = vunpack.c.l.b16 %v1368
        %v1408 = vunpack.c.l.b16 %v1369
        %v1409 = vunpack.c.l.b16 %v1370
        %v1410 = vunpack.c.l.b16 %v1371
        %v1411 = vunpack.c.l.b16 %v1372
        %v1412 = vunpack.c.l.b16 %v1373
        %v1413 = vunpack.c.l.b16 %v1374
        %v1414 = vunpack.c.l.b16 %v1375
        %v1415 = vunpack.c.l.b16 %v1376
        %v1416 = vunpack.c.l.b16 %v1377
        %v1417 = vunpack.c.l.b16 %v1378
        %v1418 = vunpack.c.l.b16 %v1379
        %v1419 = vunpack.c.l.b16 %v1380
        %v1420 = vunpack.c.l.b16 %v1381
        %v1421 = vunpack.c.l.b16 %v1382
        %v1422 = vunpack.c.l.b16 %v1383
        %v1423 = vpack.c.b16 %v1408, %v1407
        %v1424 = vpack.c.b16 %v1410, %v1409
        %v1425 = vpack.c.b16 %v1412, %v1411
        %v1426 = vpack.c.b16 %v1414, %v1413
        %v1427 = vpack.c.b16 %v1416, %v1415
        %v1428 = vpack.c.b16 %v1418, %v1417
        %v1429 = vpack.c.b16 %v1420, %v1419
        %v1430 = vpack.c.b16 %v1422, %v1421
        %1439 = vmatprep.subr.bf16.mxu0 0
        %1440 = vmatpush1.bf16.msra.mxu0 %v1430
        %1441 = vmatprep.subr.bf16.mxu0 0
        %1442 = vmatpush1.bf16.msra.mxu0 %v1429
        %1443 = vmatprep.subr.bf16.mxu0 0
        %1444 = vmatpush1.bf16.msra.mxu0 %v1428
        %1445 = vmatprep.subr.bf16.mxu0 0
        %1446 = vmatpush1.bf16.msra.mxu0 %v1427
        %1447 = vmatprep.subr.bf16.mxu0 0
        %1448 = vmatpush1.bf16.msra.mxu0 %v1426
        %1449 = vmatprep.subr.bf16.mxu0 0
        %1450 = vmatpush1.bf16.msra.mxu0 %v1425
        %1451 = vmatprep.subr.bf16.mxu0 0
        %1452 = vmatpush1.bf16.msra.mxu0 %v1424
        %1453 = vmatprep.subr.bf16.mxu0 0
        %1454 = vmatpush1.bf16.msra.mxu0 %v1423
        %1455 = vmatprep.subr.bf16.mxu0 0
        %1456 = vmatpush2.bf16.msra.mxu0 0
        %1457 = vmatprep.subr.bf16.mxu0 0
        %1458 = vmatpush2.bf16.msra.mxu0 0
        %1459 = vmatprep.subr.bf16.mxu0 0
        %1460 = vmatpush2.bf16.msra.mxu0 0
        %1461 = vmatprep.subr.bf16.mxu0 0
        %1462 = vmatpush2.bf16.msra.mxu0 0
        %1463 = vmatprep.subr.bf16.mxu0 0
        %1464 = vmatpush2.bf16.msra.mxu0 0
        %1465 = vmatprep.subr.bf16.mxu0 0
        %1466 = vmatpush2.bf16.msra.mxu0 0
        %1467 = vmatprep.subr.bf16.mxu0 0
        %1468 = vmatpush2.bf16.msra.mxu0 0
        %1469 = vmatprep.subr.bf16.mxu0 0
        %1470 = vmatpush2.bf16.msra.mxu0 0
        %1471 = vmatprep.mubr.bf16.mxu0 0
        %1472 = vmatmul.mubr.bf16.gmra.mxu0 %v1367
        %v1473 = vpop.f32.mrf.mxu0
        %v1474 = vadd.f32 %v1389, %v1473
        %v1475 = vpop.f32.mrf.mxu0
        %v1476 = vpop.f32.mrf.mxu0
        %v1477 = vadd.f32 %v1389, %v1476
        %v1478 = vpop.f32.mrf.mxu0
        %1479 = vdwg.mxu0
        %v1480 = vmax.f32 %v1474, 0.0
        %v1481 = vmax.f32 %v1477, 0.0
        %1482 = vst [vmem:[%s451] sm:$0xff] %v1480
        %1483 = vst [vmem:[%s451 + $0x8] sm:$0xff] %v1481
        %s1484 = sand.u32 %s258, 1
        %s1485 = sand.u32 %s258, 1
        %s1486 = smul.addr %s1485, 16
        %s1487 = scalar_lea.vmem [#allocation6], %s1486
        // Predicated region
        $region65: #{forward.4} parent=55 // pred_check
          %p1488 = pneg %p268
        $region66: #{forward.4} parent=55 // pred_check_branch
          %1490 = sbr.rel (%p1488) target = $region68
        $region67: #{forward.4} parent=55 // pred_region
          %s1491 = smul.addr %s26, 8
          %s1492 = scalar_lea.vmem %s9, %s1491
          // Predicated region
          $region69: #{forward.4} parent=67 // pred_check
            _
          $region70: #{forward.4} parent=67 // pred_check_branch
            %1494 = sbr.rel (0) target = $region72
          $region71: #{forward.4} parent=67 // pred_region
            // Predicated region
            $region73: #{forward.4} parent=71 // pred_check
              _
            $region74: #{forward.4} parent=71 // pred_check_branch
              %1496 = sbr.rel (0) target = $region76
            $region75: #{forward.4} parent=71 // pred_region
              // Predicated region
              $region88: #{forward.4} parent=75 // pred_check
                _
              $region89: #{forward.4} parent=75 // pred_check_branch
                %1514 = sbr.rel (0) target = $region91
              $region90: #{forward.4} parent=75 // pred_region
                loop: start=0, step=1, limit=1
                $region92: #{forward.4} parent=90 // loop_pre_header
                  _
                $region93: #{forward.4} parent=90 // loop_header
                  %s1516 = sphi 0, %s1520
                  %p1517 = scmp.ge.s32.totalorder %s1516, 1
                  %s1521 = sphi %s1487, %s1487
                  %s1522 = sphi %s1492, %s1492
                $region94: #{forward.4} parent=90 // loop_header_branch
                  %1519 = sbr.rel (%p1517) target = $region98
                $region95: #{forward.4} parent=90 // loop_body
                  %v1523 = vld [vmem:[%s1521] sm:$0xff]
                  %1524 = vst [vmem:[%s1522] sm:$0xff] %v1523
                  %v1525 = vld [vmem:[%s1521 + $0x8] sm:$0xff]
                  %1526 = vst [vmem:[%s1522 + $0x10] sm:$0xff] %v1525
                $region96: #{forward.4} parent=90 // loop_footer
                  %s1520 = sadd.s32 1, %s1516
                $region97: #{forward.4} parent=90 // loop_footer_branch
                  %1515 = sbr.rel target = $region93
                $region98: #{forward.4} parent=90 // loop_exit
                  _
              $region91: #{forward.4} parent=75 // pred_fallthru
                _
              // Predicated region
              $region99: #{forward.4} parent=75 // pred_check
                _
              $region100: #{forward.4} parent=75 // pred_check_branch
                %1528 = sbr.rel target = $region102
              $region101: #{forward.4} parent=75 // pred_region
                _
              $region102: #{forward.4} parent=75 // pred_fallthru
                _
            $region76: #{forward.4} parent=71 // pred_fallthru
              _
            // Predicated region
            $region77: #{forward.4} parent=71 // pred_check
              _
            $region78: #{forward.4} parent=71 // pred_check_branch
              %1498 = sbr.rel target = $region80
            $region79: #{forward.4} parent=71 // pred_region
              %s1500 = ssub.s32 256, 1
              loop: start=0, step=1, limit=1
              $region81: #{forward.4} parent=79 // loop_pre_header
                _
              $region82: #{forward.4} parent=79 // loop_header
                %s1502 = sphi 0, %s1506
                %p1503 = scmp.ge.s32.totalorder %s1502, 1
                %s1507 = sphi %s1487, %s1487
                %s1508 = sphi %s1492, %s1492
              $region83: #{forward.4} parent=79 // loop_header_branch
                %1505 = sbr.rel (%p1503) target = $region87
              $region84: #{forward.4} parent=79 // loop_body
                %v1509 = vld [vmem:[%s1507] sm:%s1500]
                %1510 = vst [vmem:[%s1508] sm:%s1500] %v1509
                %v1511 = vld [vmem:[%s1507 + $0x8] sm:%s1500]
                %1512 = vst [vmem:[%s1508 + $0x10] sm:%s1500] %v1511
              $region85: #{forward.4} parent=79 // loop_footer
                %s1506 = sadd.s32 1, %s1502
              $region86: #{forward.4} parent=79 // loop_footer_branch
                %1501 = sbr.rel target = $region82
              $region87: #{forward.4} parent=79 // loop_exit
                _
            $region80: #{forward.4} parent=71 // pred_fallthru
              _
          $region72: #{forward.4} parent=67 // pred_fallthru
            _
          %1529 = vnop
        $region68: #{forward.4} parent=55 // pred_fallthru
          _
      $region56: #{forward.4} parent=5 // pred_fallthru
        _
      %p1530 = scmp.le.s32.totalorder 2, %s21
      // Predicated region
      $region103: #{forward.4} parent=5 // pred_check
        %p1531 = pneg %p1530
      $region104: #{forward.4} parent=5 // pred_check_branch
        %1533 = sbr.rel (%p1531) target = $region106
      $region105: #{forward.4} parent=5 // pred_region
        %s1534 = ssub.s32 %s21, 2
        // Predicated region
        $region107: #{forward.4} parent=105 // pred_check
          %p1535 = pneg %p274
        $region108: #{forward.4} parent=105 // pred_check_branch
          %1537 = sbr.rel (%p1535) target = $region110
        $region109: #{forward.4} parent=105 // pred_region
          %s1538 = sand.u32 %s259, 1
          %s1539 = sand.u32 %s259, 1
          %s1540 = smul.addr %s1539, 16
          %s1541 = scalar_lea.vmem [#allocation6], %s1540
        $region110: #{forward.4} parent=105 // pred_fallthru
          _
      $region106: #{forward.4} parent=5 // pred_fallthru
        _
    $region6: #{forward.4} parent=1 // loop_footer
      %s25 = sadd.s32 1, %s21
    $region7: #{forward.4} parent=1 // loop_footer_branch
      %20 = sbr.rel target = $region3
    $region8: #{forward.4} parent=1 // loop_exit
      _
    %1542 = vsyncpa [#allocation3], 1
    %s1543 = scalar_lea.sflag [#allocation3], 1
    %1544 = vsyncpa %s1543, 1
    %1545 = vsyncpa [#allocation5], 1
    %s1546 = scalar_lea.sflag [#allocation5], 1
    %1547 = vsyncpa %s1546, 1

</llo_original>
